<compile_context>
chip_gen: v6e
topology: v6e:2x2x1
jax: 0.10.0
libtpu: 0.0.40
codegen_flags: <defaults>
</compile_context>

<pallas_src>
import functools

import numpy as np
import jax
import jax.numpy as jnp
from jax import lax
from jax.experimental import pallas as pl
from jax.experimental.pallas import tpu as pltpu


# ---------------------------------------------------------------------------
# Host-side helpers
# ---------------------------------------------------------------------------
@functools.lru_cache(maxsize=1)
def _vmem_limit_bytes():
    """~75% of physical VMEM (48 MiB on v7x, ~96 MiB on v5e/v6e), capped at 100 MiB."""
    cap = 64 << 20
    try:
        info = pltpu.get_tpu_info()
        cap = int(getattr(info, "vmem_capacity_bytes", cap) or cap)
    except Exception:
        pass
    return int(min(cap - cap // 4, 100 << 20))


def _row_interp_params(out_h, in_h, pad_before):
    """Per-output-row 2-tap bilinear (align_corners=True) params; rows inside the
    F.pad border get zero weights, which reproduces the zero padding for free."""
    up = 2 * in_h
    i0 = np.zeros(out_h, np.int32)
    i1 = np.zeros(out_h, np.int32)
    w0 = np.zeros(out_h, np.float32)
    w1 = np.zeros(out_h, np.float32)
    scale = (in_h - 1) / (up - 1) if up > 1 else 0.0
    for o in range(up):
        src = o * scale
        a = min(int(np.floor(src)), in_h - 1)
        b = min(a + 1, in_h - 1)
        f = src - a
        oo = o + pad_before
        i0[oo], i1[oo] = a, b
        w0[oo], w1[oo] = 1.0 - f, f
    return i0, i1, w0, w1


def _col_interp_matrix(out_w, in_w, pad_before):
    """[out_w, in_w] bilinear column-interp matrix; rows in the pad border are 0."""
    up = 2 * in_w
    A = np.zeros((out_w, in_w), np.float32)
    scale = (in_w - 1) / (up - 1) if up > 1 else 0.0
    for o in range(up):
        src = o * scale
        a = min(int(np.floor(src)), in_w - 1)
        b = min(a + 1, in_w - 1)
        f = src - a
        A[o + pad_before, a] += 1.0 - f
        A[o + pad_before, b] += f
    return A


def _pick_channel_tile(c):
    """Lane-dense channel tile (multiple of 128/256 when it divides C, else full C)."""
    if c <= 256:
        return c
    if c % 256 == 0:
        return 256
    if c % 128 == 0:
        return 128
    return c


def _largest_divisor(n, cap):
    if n <= cap:
        return n
    for d in range(cap, 0, -1):
        if n % d == 0:
            return d
    return 1


def _pick_h_tile(h, w, co_tile, budget_bytes=384 * 1024):
    """Row tile bounding the explicit f32 accumulator: tile_h*(W+2)*co_tile*4 bytes."""
    wp = w + 2
    max_rows = max(1, budget_bytes // max(1, wp * co_tile * 4))
    max_rows = int(min(max_rows, 32, h))
    return _largest_divisor(h, max_rows)


# ---------------------------------------------------------------------------
# Pallas kernel: bilinear 2x upsample (align_corners=True) + fused zero-pad
# ---------------------------------------------------------------------------
def _upsample_kernel(i0_ref, i1_ref, w0_ref, w1_ref, x_ref, aw_ref, o_ref, *, tile_ho):
    """One grid step emits `tile_ho` output rows for one (image, channel-tile)."""
    ho0 = pl.program_id(2) * tile_ho
    aw = aw_ref[...]                                            # [Wo, W] bf16 (hoisted)
    for r in range(tile_ho):                                    # small static unroll
        o = ho0 + r
        # Row pass: 2-tap blend of two source rows (SMEM taps/weights); weights
        # are zero for rows inside the F.pad border -> whole row becomes zero.
        row = (w0_ref[o] * x_ref[0, i0_ref[o]]
               + w1_ref[o] * x_ref[0, i1_ref[o]]).astype(jnp.bfloat16)   # [W, C]
        # Column pass on the MXU; aw's padded output columns are zero rows.
        y = lax.dot_general(aw, row, dimension_numbers=(((1,), (0,)), ((), ())),
                            preferred_element_type=jnp.float32)          # [Wo, C]
        o_ref[0, r] = y.astype(o_ref.dtype)


def bilinear_upsample_to(x, out_h, out_w, *, out_dtype=None):
    """NHWC bilinear 2x upsample (align_corners=True), zero-padded to (out_h, out_w)."""
    N, H, W, C = x.shape
    assert out_h >= 2 * H and out_w >= 2 * W
    out_dtype = out_dtype or x.dtype
    x = x.astype(jnp.bfloat16)

    i0, i1, w0, w1 = _row_interp_params(out_h, H, (out_h - 2 * H) // 2)
    aw = jnp.asarray(_col_interp_matrix(out_w, W, (out_w - 2 * W) // 2)
                     ).astype(jnp.bfloat16)
    i0, i1 = jnp.asarray(i0), jnp.asarray(i1)
    w0, w1 = jnp.asarray(w0), jnp.asarray(w1)

    tile_c = _pick_channel_tile(C)
    tile_ho = _largest_divisor(out_h, 16)
    kern = functools.partial(_upsample_kernel, tile_ho=tile_ho)
    smem = pl.BlockSpec(memory_space=pltpu.MemorySpace.SMEM)
    return pl.pallas_call(
        kern,
        out_shape=jax.ShapeDtypeStruct((N, out_h, out_w, C), out_dtype),
        grid=(N, C // tile_c, out_h // tile_ho),
        in_specs=[
            smem, smem, smem, smem,                                        # i0,i1,w0,w1
            pl.BlockSpec((1, H, W, tile_c), lambda n, c, h: (n, 0, 0, c)),  # x (resident)
            pl.BlockSpec((out_w, W), lambda n, c, h: (0, 0)),               # aw
        ],
        out_specs=pl.BlockSpec((1, tile_ho, out_w, tile_c),
                               lambda n, c, h: (n, h, 0, c)),
        compiler_params=pltpu.CompilerParams(
            dimension_semantics=("parallel", "parallel", "parallel"),
            vmem_limit_bytes=_vmem_limit_bytes()),
    )(i0, i1, w0, w1, x, aw)


# ---------------------------------------------------------------------------
# Pallas kernel: 3x3 conv (pad=1, halo + channel concat fused) + BN + ReLU
# ---------------------------------------------------------------------------
def _conv3x3_bn_relu_kernel(*refs, n_in, H, W, tile_h, cins):
    xs = refs[:n_in]                                   # each [1, H, W, Ci] bf16
    w_ref, s_ref, b_ref, o_ref, xflat, acc_ref = refs[n_in:]
    Wp = W + 2
    L = tile_h * Wp
    cin = xflat.shape[-1]

    co_id = pl.program_id(1)
    h_id = pl.program_id(2)

    # ---- Fill the flat [(H+2)*(W+2)+2, Cin] zero-padded, channel-concatenated
    # bf16 scratch once per image (fuses F.pad's halo and torch.cat: no HBM
    # round trips).  Only the 1-px border is zeroed; the interior is overwritten.
    # NOTE: relies on the co/h axes being sequential ("arbitrary").
    # TODO(synk): per-h-tile halo DMA (pl.ANY inputs) would drop the whole-image
    # scratch and let the co axis go "parallel" for v7x megacore.
    @pl.when(jnp.logical_and(co_id == 0, h_id == 0))
    def _():
        xflat[0:Wp + 1, :] = jnp.zeros((Wp + 1, cin), xflat.dtype)         # top pad row
        tail = (H + 1) * Wp
        xflat[tail:tail + Wp + 2, :] = jnp.zeros((Wp + 2, cin), xflat.dtype)  # bottom + tail
        z2 = jnp.zeros((2, cin), xflat.dtype)

        def fill_row(h, carry):
            base = (h + 1) * Wp
            off = 0
            for x_ref, ci in zip(xs, cins):
                xflat[pl.ds(base + 1, W), off:off + ci] = x_ref[0, h].astype(xflat.dtype)
                off += ci
            # right pad of this row + left pad of the next row (adjacent slots)
            xflat[pl.ds(base + W + 1, 2), :] = z2
            return carry

        lax.fori_loop(0, H, fill_row, 0)

    # ---- 3x3 conv: 9 big-M 2D MXU matmuls [tile_h*(W+2), Cin] x [Cin, tile_co]
    # over the merged channel slab, accumulated into an explicit f32 VMEM scratch.
    h0 = h_id * tile_h
    for tap in range(9):
        ky, kx = tap // 3, tap % 3
        start = (h0 + ky) * Wp + kx
        patch = xflat[pl.ds(start, L), :]                                  # [L, Cin]
        contrib = lax.dot_general(patch, w_ref[tap],
                                  dimension_numbers=(((1,), (0,)), ((), ())),
                                  preferred_element_type=jnp.float32)     # [L, tile_co]
        if tap == 0:
            acc_ref[...] = contrib
        else:
            acc_ref[...] += contrib

    # ---- Folded BatchNorm (inference) + ReLU epilogue in f32; the per-row
    # extraction drops the 2 junk (pad) columns between rows of the flat acc.
    sc = s_ref[0]
    bi = b_ref[0]
    for hl in range(tile_h):
        row = acc_ref[hl * Wp:hl * Wp + W, :]
        o_ref[0, hl] = jnp.maximum(row * sc + bi, 0.0).astype(o_ref.dtype)


def conv3x3_bn_relu(xs, w, scale, bias, *, out_dtype=None):
    """3x3 conv (pad=1) + per-channel scale/bias + ReLU.

    xs: list of NHWC inputs sharing (N, H, W); their channel dims are logically
        concatenated (the concat is fused into the padded VMEM scratch).
    w:  [3, 3, sum(Ci), Cout] HWIO weights.
    """
    N, H, W, _ = xs[0].shape
    cins = [int(x.shape[-1]) for x in xs]
    cin = sum(cins)
    cout = int(w.shape[-1])
    assert tuple(int(s) for s in w.shape[:3]) == (3, 3, cin)
    out_dtype = out_dtype or xs[0].dtype

    xs = [x.astype(jnp.bfloat16) for x in xs]              # bf16 DMA / VMEM residency
    w_slab = w.reshape(9, cin, cout).astype(jnp.bfloat16)  # single merged weight slab
    scale2 = scale.reshape(1, cout).astype(jnp.float32)
    bias2 = bias.reshape(1, cout).astype(jnp.float32)

    tile_co = _pick_channel_tile(cout)
    tile_h = _pick_h_tile(H, W, tile_co)
    Wp = W + 2
    grid = (N, cout // tile_co, H // tile_h)

    kern = functools.partial(_conv3x3_bn_relu_kernel, n_in=len(xs),
                             H=H, W=W, tile_h=tile_h, cins=tuple(cins))
    in_specs = (
        [pl.BlockSpec((1, H, W, ci), lambda n, co, h: (n, 0, 0, 0)) for ci in cins]
        + [pl.BlockSpec((9, cin, tile_co), lambda n, co, h: (0, 0, co)),
           pl.BlockSpec((1, tile_co), lambda n, co, h: (0, co)),
           pl.BlockSpec((1, tile_co), lambda n, co, h: (0, co))]
    )
    return pl.pallas_call(
        kern,
        out_shape=jax.ShapeDtypeStruct((N, H, W, cout), out_dtype),
        grid=grid,
        in_specs=in_specs,
        out_specs=pl.BlockSpec((1, tile_h, W, tile_co), lambda n, co, h: (n, h, 0, co)),
        scratch_shapes=[pltpu.VMEM(((H + 2) * Wp + 2, cin), jnp.bfloat16),
                        pltpu.VMEM((tile_h * Wp, tile_co), jnp.float32)],
        compiler_params=pltpu.CompilerParams(
            # N is safe to shard across cores; co/h reuse the per-image padded
            # scratch filled at (co==0, h==0), so they must stay "arbitrary".
            dimension_semantics=("parallel", "arbitrary", "arbitrary"),
            vmem_limit_bytes=_vmem_limit_bytes()),
    )(*xs, w_slab, scale2, bias2)


# ---------------------------------------------------------------------------
# Up module (bilinear=True) with deterministic parameters
# ---------------------------------------------------------------------------
class UpPallas:
    def __init__(self, in_channels, out_channels, key, bilinear=True):
        assert bilinear, "only the bilinear=True branch is implemented"
        mid = in_channels // 2
        k1, k2, k3, k4 = jax.random.split(key, 4)
        eps = 1e-5

        self.w1 = jax.random.normal(k1, (3, 3, in_channels, mid), jnp.float32) \
            / np.sqrt(9 * in_channels)
        b1 = jax.random.normal(k2, (mid,), jnp.float32) * 0.01
        self.w2 = jax.random.normal(k3, (3, 3, mid, out_channels), jnp.float32) \
            / np.sqrt(9 * mid)
        b2 = jax.random.normal(k4, (out_channels,), jnp.float32) * 0.01

        # BatchNorm2d defaults (inference): gamma=1, beta=0, mean=0, var=1
        # TODO(synk): training-mode BatchNorm (batch statistics) is not reproduced.
        g1, beta1, m1, v1 = (jnp.ones(mid), jnp.zeros(mid), jnp.zeros(mid), jnp.ones(mid))
        g2, beta2, m2, v2 = (jnp.ones(out_channels), jnp.zeros(out_channels),
                             jnp.zeros(out_channels), jnp.ones(out_channels))
        self.s1 = g1 / jnp.sqrt(v1 + eps)
        self.bias1 = (b1 - m1) * self.s1 + beta1
        self.s2 = g2 / jnp.sqrt(v2 + eps)
        self.bias2 = (b2 - m2) * self.s2 + beta2

    def __call__(self, x1, x2):
        out_dtype = x2.dtype
        # NCHW -> NHWC at the module boundary; bf16 activations end-to-end inside.
        x1 = jnp.transpose(x1, (0, 2, 3, 1)).astype(jnp.bfloat16)
        x2 = jnp.transpose(x2, (0, 2, 3, 1)).astype(jnp.bfloat16)
        H2, W2 = int(x2.shape[1]), int(x2.shape[2])
        # Upsample + F.pad fused into one kernel; bf16 intermediate.
        x1u = bilinear_upsample_to(x1, H2, W2, out_dtype=jnp.bfloat16)
        # TODO(synk): fuse the upsample into conv #1 to drop the x1u HBM round trip.
        # conv #1: channel concat fused into the padded scratch; bf16 mid activation.
        y = conv3x3_bn_relu([x2, x1u], self.w1, self.s1, self.bias1,
                            out_dtype=jnp.bfloat16)
        # conv #2: back to the caller's dtype.
        y = conv3x3_bn_relu([y], self.w2, self.s2, self.bias2, out_dtype=out_dtype)
        return jnp.transpose(y, (0, 3, 1, 2))


# ---------------------------------------------------------------------------
# Plain-JAX reference (mirrors PyTorch forward + the kernels' bf16 policy)
# ---------------------------------------------------------------------------
def _ref_up(x1_nchw, x2_nchw, mod):
    bf16, f32 = jnp.bfloat16, jnp.float32
    x1 = jnp.transpose(x1_nchw, (0, 2, 3, 1)).astype(bf16)
    x2 = jnp.transpose(x2_nchw, (0, 2, 3, 1)).astype(bf16)
    N, H1, W1, C1 = x1.shape
    H2, W2 = int(x2.shape[1]), int(x2.shape[2])

    i0, i1, w0, w1 = _row_interp_params(H2, H1, (H2 - 2 * H1) // 2)
    aw = jnp.asarray(_col_interp_matrix(W2, W1, (W2 - 2 * W1) // 2)).astype(bf16)
    x1f = x1.astype(f32)
    rows = (jnp.asarray(w0)[None, :, None, None] * x1f[:, i0]
            + jnp.asarray(w1)[None, :, None, None] * x1f[:, i1]).astype(bf16)
    x1u = jnp.einsum('pw,nhwc->nhpc', aw.astype(f32), rows.astype(f32)).astype(bf16)

    x = jnp.concatenate([x2, x1u], axis=-1)

    def conv_bn_relu(x, w, s, b, out_dtype):
        y = lax.conv_general_dilated(
            x.astype(bf16), w.astype(bf16), window_strides=(1, 1), padding='SAME',
            dimension_numbers=('NHWC', 'HWIO', 'NHWC'),
            preferred_element_type=f32)
        y = y * s + b
        return jnp.maximum(y, 0.0).astype(out_dtype)

    y = conv_bn_relu(x, mod.w1, mod.s1, mod.bias1, bf16)
    y = conv_bn_relu(y, mod.w2, mod.s2, mod.bias2, f32)
    return jnp.transpose(y, (0, 3, 1, 2))


if __name__ == "__main__":
    key = jax.random.PRNGKey(0)
    kx1, kx2, kp, kx3, kx4 = jax.random.split(key, 5)

    N = 2
    in_channels, out_channels = 8, 4              # concat of two 4-channel maps -> 8
    x1 = jax.random.normal(kx1, (N, in_channels // 2, 8, 8), jnp.float32)     # deep feature
    x2 = jax.random.normal(kx2, (N, in_channels // 2, 16, 16), jnp.float32)   # skip connection

    up = UpPallas(in_channels, out_channels, kp, bilinear=True)
    out = jax.block_until_ready(up(x1, x2))
    ref = _ref_up(x1, x2, up)
    np.testing.assert_allclose(np.asarray(out), np.asarray(ref), atol=2e-2, rtol=2e-2)
    assert out.shape == (N, out_channels, 16, 16)

    # Second case exercises the fused F.pad path (x2 larger than 2*x1 spatially)
    # and a non-multiple-of-8 spatial size.
    x1b = jax.random.normal(kx3, (1, in_channels // 2, 6, 6), jnp.float32)
    x2b = jax.random.normal(kx4, (1, in_channels // 2, 14, 14), jnp.float32)
    outb = jax.block_until_ready(up(x1b, x2b))
    refb = _ref_up(x1b, x2b, up)
    np.testing.assert_allclose(np.asarray(outb), np.asarray(refb), atol=2e-2, rtol=2e-2)
    assert outb.shape == (1, out_channels, 14, 14)

    print("KERNEL_OK")
</pallas_src>

<mosaic_0001>
module attributes {stable_mosaic.version = 11 : i64} {
  func.func @_upsample_kernel(%arg0: i32, %arg1: i32, %arg2: i32, %arg3: memref<16xi32, #tpu.memory_space<smem>>, %arg4: memref<16xi32, #tpu.memory_space<smem>>, %arg5: memref<16xf32, #tpu.memory_space<smem>>, %arg6: memref<16xf32, #tpu.memory_space<smem>>, %arg7: memref<1x8x8x4xbf16, #tpu.memory_space<vmem>>, %arg8: memref<16x8xbf16, #tpu.memory_space<vmem>>, %arg9: memref<1x16x16x4xbf16, #tpu.memory_space<vmem>>) attributes {dimension_semantics = [#tpu.dimension_semantics<parallel>, #tpu.dimension_semantics<parallel>, #tpu.dimension_semantics<parallel>], iteration_bounds = array<i64: 2, 1, 1>, scalar_prefetch = 0 : i64, scratch_operands = 0 : i64, tpu.core_type = #tpu.core_type<tc>, window_params = [{transform_indices = @transform_0, window_bounds = array<i64: 16>}, {transform_indices = @transform_1, window_bounds = array<i64: 16>}, {transform_indices = @transform_2, window_bounds = array<i64: 16>}, {transform_indices = @transform_3, window_bounds = array<i64: 16>}, {transform_indices = @transform_4, window_bounds = array<i64: 1, 8, 8, 4>}, {pipeline_mode = #tpu.pipeline_mode<synchronous>, transform_indices = @transform_5, window_bounds = array<i64: 16, 8>}, {transform_indices = @transform_6, window_bounds = array<i64: 1, 16, 16, 4>}]} {
    %c16_i32 = arith.constant 16 : i32
    %0 = arith.muli %arg2, %c16_i32 : i32
    %c0 = arith.constant 0 : index
    %c0_0 = arith.constant 0 : index
    %1 = vector.load %arg8[%c0, %c0_0] : memref<16x8xbf16, #tpu.memory_space<vmem>>, vector<16x8xbf16>
    %c0_i32 = arith.constant 0 : i32
    %2 = arith.addi %0, %c0_i32 : i32
    %3 = arith.index_cast %2 : i32 to index
    %4 = memref.load %arg5[%3] : memref<16xf32, #tpu.memory_space<smem>>
    %5 = arith.index_cast %2 : i32 to index
    %6 = memref.load %arg3[%5] : memref<16xi32, #tpu.memory_space<smem>>
    %c0_1 = arith.constant 0 : index
    %7 = arith.index_cast %6 : i32 to index
    %c0_2 = arith.constant 0 : index
    %c0_3 = arith.constant 0 : index
    %8 = vector.load %arg7[%c0_1, %7, %c0_2, %c0_3] : memref<1x8x8x4xbf16, #tpu.memory_space<vmem>>, vector<1x1x8x4xbf16>
    %9 = vector.shape_cast %8 : vector<1x1x8x4xbf16> to vector<8x4xbf16>
    %10 = arith.extf %9 : vector<8x4xbf16> to vector<8x4xf32>
    %11 = vector.broadcast %4 : f32 to vector<8x4xf32>
    %12 = arith.mulf %11, %10 : vector<8x4xf32>
    %13 = arith.index_cast %2 : i32 to index
    %14 = memref.load %arg6[%13] : memref<16xf32, #tpu.memory_space<smem>>
    %15 = arith.index_cast %2 : i32 to index
    %16 = memref.load %arg4[%15] : memref<16xi32, #tpu.memory_space<smem>>
    %c0_4 = arith.constant 0 : index
    %17 = arith.index_cast %16 : i32 to index
    %c0_5 = arith.constant 0 : index
    %c0_6 = arith.constant 0 : index
    %18 = vector.load %arg7[%c0_4, %17, %c0_5, %c0_6] : memref<1x8x8x4xbf16, #tpu.memory_space<vmem>>, vector<1x1x8x4xbf16>
    %19 = vector.shape_cast %18 : vector<1x1x8x4xbf16> to vector<8x4xbf16>
    %20 = arith.extf %19 : vector<8x4xbf16> to vector<8x4xf32>
    %21 = vector.broadcast %14 : f32 to vector<8x4xf32>
    %22 = arith.mulf %21, %20 : vector<8x4xf32>
    %23 = arith.addf %12, %22 : vector<8x4xf32>
    %24 = arith.truncf %23 : vector<8x4xf32> to vector<8x4xbf16>
    %cst = arith.constant dense<0.000000e+00> : vector<16x4xf32>
    %25 = tpu.matmul %1, %24, %cst {dimension_numbers = #tpu.dot_dimension_numbers<[1], [0], [0], [1], [0, 0, 1, 1], [], []>} : vector<16x8xbf16>, vector<8x4xbf16>, vector<16x4xf32> -> vector<16x4xf32>
    %26 = arith.truncf %25 : vector<16x4xf32> to vector<16x4xbf16>
    %c0_7 = arith.constant 0 : index
    %c0_8 = arith.constant 0 : index
    %c0_9 = arith.constant 0 : index
    %c0_10 = arith.constant 0 : index
    %27 = vector.load %arg9[%c0_7, %c0_8, %c0_9, %c0_10] : memref<1x16x16x4xbf16, #tpu.memory_space<vmem>>, vector<1x1x16x4xbf16>
    %28 = vector.shape_cast %27 : vector<1x1x16x4xbf16> to vector<16x4xbf16>
    %29 = vector.shape_cast %26 : vector<16x4xbf16> to vector<1x1x16x4xbf16>
    tpu.vector_store %arg9[%c0_7, %c0_8, %c0_9, %c0_10], %29 {strides = array<i32>} : memref<1x16x16x4xbf16, #tpu.memory_space<vmem>>, vector<1x1x16x4xbf16>,
    %c1_i32 = arith.constant 1 : i32
    %30 = arith.addi %0, %c1_i32 : i32
    %31 = arith.index_cast %30 : i32 to index
    %32 = memref.load %arg5[%31] : memref<16xf32, #tpu.memory_space<smem>>
    %33 = arith.index_cast %30 : i32 to index
    %34 = memref.load %arg3[%33] : memref<16xi32, #tpu.memory_space<smem>>
    %c0_11 = arith.constant 0 : index
    %35 = arith.index_cast %34 : i32 to index
    %c0_12 = arith.constant 0 : index
    %c0_13 = arith.constant 0 : index
    %36 = vector.load %arg7[%c0_11, %35, %c0_12, %c0_13] : memref<1x8x8x4xbf16, #tpu.memory_space<vmem>>, vector<1x1x8x4xbf16>
    %37 = vector.shape_cast %36 : vector<1x1x8x4xbf16> to vector<8x4xbf16>
    %38 = arith.extf %37 : vector<8x4xbf16> to vector<8x4xf32>
    %39 = vector.broadcast %32 : f32 to vector<8x4xf32>
    %40 = arith.mulf %39, %38 : vector<8x4xf32>
    %41 = arith.index_cast %30 : i32 to index
    %42 = memref.load %arg6[%41] : memref<16xf32, #tpu.memory_space<smem>>
    %43 = arith.index_cast %30 : i32 to index
    %44 = memref.load %arg4[%43] : memref<16xi32, #tpu.memory_space<smem>>
    %c0_14 = arith.constant 0 : index
    %45 = arith.index_cast %44 : i32 to index
    %c0_15 = arith.constant 0 : index
    %c0_16 = arith.constant 0 : index
    %46 = vector.load %arg7[%c0_14, %45, %c0_15, %c0_16] : memref<1x8x8x4xbf16, #tpu.memory_space<vmem>>, vector<1x1x8x4xbf16>
    %47 = vector.shape_cast %46 : vector<1x1x8x4xbf16> to vector<8x4xbf16>
    %48 = arith.extf %47 : vector<8x4xbf16> to vector<8x4xf32>
    %49 = vector.broadcast %42 : f32 to vector<8x4xf32>
    %50 = arith.mulf %49, %48 : vector<8x4xf32>
    %51 = arith.addf %40, %50 : vector<8x4xf32>
    %52 = arith.truncf %51 : vector<8x4xf32> to vector<8x4xbf16>
    %cst_17 = arith.constant dense<0.000000e+00> : vector<16x4xf32>
    %53 = tpu.matmul %1, %52, %cst_17 {dimension_numbers = #tpu.dot_dimension_numbers<[1], [0], [0], [1], [0, 0, 1, 1], [], []>} : vector<16x8xbf16>, vector<8x4xbf16>, vector<16x4xf32> -> vector<16x4xf32>
    %54 = arith.truncf %53 : vector<16x4xf32> to vector<16x4xbf16>
    %c0_18 = arith.constant 0 : index
    %c1 = arith.constant 1 : index
    %c0_19 = arith.constant 0 : index
    %c0_20 = arith.constant 0 : index
    %55 = vector.load %arg9[%c0_18, %c1, %c0_19, %c0_20] : memref<1x16x16x4xbf16, #tpu.memory_space<vmem>>, vector<1x1x16x4xbf16>
    %56 = vector.shape_cast %55 : vector<1x1x16x4xbf16> to vector<16x4xbf16>
    %57 = vector.shape_cast %54 : vector<16x4xbf16> to vector<1x1x16x4xbf16>
    tpu.vector_store %arg9[%c0_18, %c1, %c0_19, %c0_20], %57 {strides = array<i32>} : memref<1x16x16x4xbf16, #tpu.memory_space<vmem>>, vector<1x1x16x4xbf16>,
    %c2_i32 = arith.constant 2 : i32
    %58 = arith.addi %0, %c2_i32 : i32
    %59 = arith.index_cast %58 : i32 to index
    %60 = memref.load %arg5[%59] : memref<16xf32, #tpu.memory_space<smem>>
    %61 = arith.index_cast %58 : i32 to index
    %62 = memref.load %arg3[%61] : memref<16xi32, #tpu.memory_space<smem>>
    %c0_21 = arith.constant 0 : index
    %63 = arith.index_cast %62 : i32 to index
    %c0_22 = arith.constant 0 : index
    %c0_23 = arith.constant 0 : index
    %64 = vector.load %arg7[%c0_21, %63, %c0_22, %c0_23] : memref<1x8x8x4xbf16, #tpu.memory_space<vmem>>, vector<1x1x8x4xbf16>
    %65 = vector.shape_cast %64 : vector<1x1x8x4xbf16> to vector<8x4xbf16>
    %66 = arith.extf %65 : vector<8x4xbf16> to vector<8x4xf32>
    %67 = vector.broadcast %60 : f32 to vector<8x4xf32>
    %68 = arith.mulf %67, %66 : vector<8x4xf32>
    %69 = arith.index_cast %58 : i32 to index
    %70 = memref.load %arg6[%69] : memref<16xf32, #tpu.memory_space<smem>>
    %71 = arith.index_cast %58 : i32 to index
    %72 = memref.load %arg4[%71] : memref<16xi32, #tpu.memory_space<smem>>
    %c0_24 = arith.constant 0 : index
    %73 = arith.index_cast %72 : i32 to index
    %c0_25 = arith.constant 0 : index
    %c0_26 = arith.constant 0 : index
    %74 = vector.load %arg7[%c0_24, %73, %c0_25, %c0_26] : memref<1x8x8x4xbf16, #tpu.memory_space<vmem>>, vector<1x1x8x4xbf16>
    %75 = vector.shape_cast %74 : vector<1x1x8x4xbf16> to vector<8x4xbf16>
    %76 = arith.extf %75 : vector<8x4xbf16> to vector<8x4xf32>
    %77 = vector.broadcast %70 : f32 to vector<8x4xf32>
    %78 = arith.mulf %77, %76 : vector<8x4xf32>
    %79 = arith.addf %68, %78 : vector<8x4xf32>
    %80 = arith.truncf %79 : vector<8x4xf32> to vector<8x4xbf16>
    %cst_27 = arith.constant dense<0.000000e+00> : vector<16x4xf32>
    %81 = tpu.matmul %1, %80, %cst_27 {dimension_numbers = #tpu.dot_dimension_numbers<[1], [0], [0], [1], [0, 0, 1, 1], [], []>} : vector<16x8xbf16>, vector<8x4xbf16>, vector<16x4xf32> -> vector<16x4xf32>
    %82 = arith.truncf %81 : vector<16x4xf32> to vector<16x4xbf16>
    %c0_28 = arith.constant 0 : index
    %c2 = arith.constant 2 : index
    %c0_29 = arith.constant 0 : index
    %c0_30 = arith.constant 0 : index
    %83 = vector.load %arg9[%c0_28, %c2, %c0_29, %c0_30] : memref<1x16x16x4xbf16, #tpu.memory_space<vmem>>, vector<1x1x16x4xbf16>
    %84 = vector.shape_cast %83 : vector<1x1x16x4xbf16> to vector<16x4xbf16>
    %85 = vector.shape_cast %82 : vector<16x4xbf16> to vector<1x1x16x4xbf16>
    tpu.vector_store %arg9[%c0_28, %c2, %c0_29, %c0_30], %85 {strides = array<i32>} : memref<1x16x16x4xbf16, #tpu.memory_space<vmem>>, vector<1x1x16x4xbf16>,
    %c3_i32 = arith.constant 3 : i32
    %86 = arith.addi %0, %c3_i32 : i32
    %87 = arith.index_cast %86 : i32 to index
    %88 = memref.load %arg5[%87] : memref<16xf32, #tpu.memory_space<smem>>
    %89 = arith.index_cast %86 : i32 to index
    %90 = memref.load %arg3[%89] : memref<16xi32, #tpu.memory_space<smem>>
    %c0_31 = arith.constant 0 : index
    %91 = arith.index_cast %90 : i32 to index
    %c0_32 = arith.constant 0 : index
    %c0_33 = arith.constant 0 : index
    %92 = vector.load %arg7[%c0_31, %91, %c0_32, %c0_33] : memref<1x8x8x4xbf16, #tpu.memory_space<vmem>>, vector<1x1x8x4xbf16>
    %93 = vector.shape_cast %92 : vector<1x1x8x4xbf16> to vector<8x4xbf16>
    %94 = arith.extf %93 : vector<8x4xbf16> to vector<8x4xf32>
    %95 = vector.broadcast %88 : f32 to vector<8x4xf32>
    %96 = arith.mulf %95, %94 : vector<8x4xf32>
    %97 = arith.index_cast %86 : i32 to index
    %98 = memref.load %arg6[%97] : memref<16xf32, #tpu.memory_space<smem>>
    %99 = arith.index_cast %86 : i32 to index
    %100 = memref.load %arg4[%99] : memref<16xi32, #tpu.memory_space<smem>>
    %c0_34 = arith.constant 0 : index
    %101 = arith.index_cast %100 : i32 to index
    %c0_35 = arith.constant 0 : index
    %c0_36 = arith.constant 0 : index
    %102 = vector.load %arg7[%c0_34, %101, %c0_35, %c0_36] : memref<1x8x8x4xbf16, #tpu.memory_space<vmem>>, vector<1x1x8x4xbf16>
    %103 = vector.shape_cast %102 : vector<1x1x8x4xbf16> to vector<8x4xbf16>
    %104 = arith.extf %103 : vector<8x4xbf16> to vector<8x4xf32>
    %105 = vector.broadcast %98 : f32 to vector<8x4xf32>
    %106 = arith.mulf %105, %104 : vector<8x4xf32>
    %107 = arith.addf %96, %106 : vector<8x4xf32>
    %108 = arith.truncf %107 : vector<8x4xf32> to vector<8x4xbf16>
    %cst_37 = arith.constant dense<0.000000e+00> : vector<16x4xf32>
    %109 = tpu.matmul %1, %108, %cst_37 {dimension_numbers = #tpu.dot_dimension_numbers<[1], [0], [0], [1], [0, 0, 1, 1], [], []>} : vector<16x8xbf16>, vector<8x4xbf16>, vector<16x4xf32> -> vector<16x4xf32>
    %110 = arith.truncf %109 : vector<16x4xf32> to vector<16x4xbf16>
    %c0_38 = arith.constant 0 : index
    %c3 = arith.constant 3 : index
    %c0_39 = arith.constant 0 : index
    %c0_40 = arith.constant 0 : index
    %111 = vector.load %arg9[%c0_38, %c3, %c0_39, %c0_40] : memref<1x16x16x4xbf16, #tpu.memory_space<vmem>>, vector<1x1x16x4xbf16>
    %112 = vector.shape_cast %111 : vector<1x1x16x4xbf16> to vector<16x4xbf16>
    %113 = vector.shape_cast %110 : vector<16x4xbf16> to vector<1x1x16x4xbf16>
    tpu.vector_store %arg9[%c0_38, %c3, %c0_39, %c0_40], %113 {strides = array<i32>} : memref<1x16x16x4xbf16, #tpu.memory_space<vmem>>, vector<1x1x16x4xbf16>,
    %c4_i32 = arith.constant 4 : i32
    %114 = arith.addi %0, %c4_i32 : i32
    %115 = arith.index_cast %114 : i32 to index
    %116 = memref.load %arg5[%115] : memref<16xf32, #tpu.memory_space<smem>>
    %117 = arith.index_cast %114 : i32 to index
    %118 = memref.load %arg3[%117] : memref<16xi32, #tpu.memory_space<smem>>
    %c0_41 = arith.constant 0 : index
    %119 = arith.index_cast %118 : i32 to index
    %c0_42 = arith.constant 0 : index
    %c0_43 = arith.constant 0 : index
    %120 = vector.load %arg7[%c0_41, %119, %c0_42, %c0_43] : memref<1x8x8x4xbf16, #tpu.memory_space<vmem>>, vector<1x1x8x4xbf16>
    %121 = vector.shape_cast %120 : vector<1x1x8x4xbf16> to vector<8x4xbf16>
    %122 = arith.extf %121 : vector<8x4xbf16> to vector<8x4xf32>
    %123 = vector.broadcast %116 : f32 to vector<8x4xf32>
    %124 = arith.mulf %123, %122 : vector<8x4xf32>
    %125 = arith.index_cast %114 : i32 to index
    %126 = memref.load %arg6[%125] : memref<16xf32, #tpu.memory_space<smem>>
    %127 = arith.index_cast %114 : i32 to index
    %128 = memref.load %arg4[%127] : memref<16xi32, #tpu.memory_space<smem>>
    %c0_44 = arith.constant 0 : index
    %129 = arith.index_cast %128 : i32 to index
    %c0_45 = arith.constant 0 : index
    %c0_46 = arith.constant 0 : index
    %130 = vector.load %arg7[%c0_44, %129, %c0_45, %c0_46] : memref<1x8x8x4xbf16, #tpu.memory_space<vmem>>, vector<1x1x8x4xbf16>
    %131 = vector.shape_cast %130 : vector<1x1x8x4xbf16> to vector<8x4xbf16>
    %132 = arith.extf %131 : vector<8x4xbf16> to vector<8x4xf32>
    %133 = vector.broadcast %126 : f32 to vector<8x4xf32>
    %134 = arith.mulf %133, %132 : vector<8x4xf32>
    %135 = arith.addf %124, %134 : vector<8x4xf32>
    %136 = arith.truncf %135 : vector<8x4xf32> to vector<8x4xbf16>
    %cst_47 = arith.constant dense<0.000000e+00> : vector<16x4xf32>
    %137 = tpu.matmul %1, %136, %cst_47 {dimension_numbers = #tpu.dot_dimension_numbers<[1], [0], [0], [1], [0, 0, 1, 1], [], []>} : vector<16x8xbf16>, vector<8x4xbf16>, vector<16x4xf32> -> vector<16x4xf32>
    %138 = arith.truncf %137 : vector<16x4xf32> to vector<16x4xbf16>
    %c0_48 = arith.constant 0 : index
    %c4 = arith.constant 4 : index
    %c0_49 = arith.constant 0 : index
    %c0_50 = arith.constant 0 : index
    %139 = vector.load %arg9[%c0_48, %c4, %c0_49, %c0_50] : memref<1x16x16x4xbf16, #tpu.memory_space<vmem>>, vector<1x1x16x4xbf16>
    %140 = vector.shape_cast %139 : vector<1x1x16x4xbf16> to vector<16x4xbf16>
    %141 = vector.shape_cast %138 : vector<16x4xbf16> to vector<1x1x16x4xbf16>
    tpu.vector_store %arg9[%c0_48, %c4, %c0_49, %c0_50], %141 {strides = array<i32>} : memref<1x16x16x4xbf16, #tpu.memory_space<vmem>>, vector<1x1x16x4xbf16>,
    %c5_i32 = arith.constant 5 : i32
    %142 = arith.addi %0, %c5_i32 : i32
    %143 = arith.index_cast %142 : i32 to index
    %144 = memref.load %arg5[%143] : memref<16xf32, #tpu.memory_space<smem>>
    %145 = arith.index_cast %142 : i32 to index
    %146 = memref.load %arg3[%145] : memref<16xi32, #tpu.memory_space<smem>>
    %c0_51 = arith.constant 0 : index
    %147 = arith.index_cast %146 : i32 to index
    %c0_52 = arith.constant 0 : index
    %c0_53 = arith.constant 0 : index
    %148 = vector.load %arg7[%c0_51, %147, %c0_52, %c0_53] : memref<1x8x8x4xbf16, #tpu.memory_space<vmem>>, vector<1x1x8x4xbf16>
    %149 = vector.shape_cast %148 : vector<1x1x8x4xbf16> to vector<8x4xbf16>
    %150 = arith.extf %149 : vector<8x4xbf16> to vector<8x4xf32>
    %151 = vector.broadcast %144 : f32 to vector<8x4xf32>
    %152 = arith.mulf %151, %150 : vector<8x4xf32>
    %153 = arith.index_cast %142 : i32 to index
    %154 = memref.load %arg6[%153] : memref<16xf32, #tpu.memory_space<smem>>
    %155 = arith.index_cast %142 : i32 to index
    %156 = memref.load %arg4[%155] : memref<16xi32, #tpu.memory_space<smem>>
    %c0_54 = arith.constant 0 : index
    %157 = arith.index_cast %156 : i32 to index
    %c0_55 = arith.constant 0 : index
    %c0_56 = arith.constant 0 : index
    %158 = vector.load %arg7[%c0_54, %157, %c0_55, %c0_56] : memref<1x8x8x4xbf16, #tpu.memory_space<vmem>>, vector<1x1x8x4xbf16>
    %159 = vector.shape_cast %158 : vector<1x1x8x4xbf16> to vector<8x4xbf16>
    %160 = arith.extf %159 : vector<8x4xbf16> to vector<8x4xf32>
    %161 = vector.broadcast %154 : f32 to vector<8x4xf32>
    %162 = arith.mulf %161, %160 : vector<8x4xf32>
    %163 = arith.addf %152, %162 : vector<8x4xf32>
    %164 = arith.truncf %163 : vector<8x4xf32> to vector<8x4xbf16>
    %cst_57 = arith.constant dense<0.000000e+00> : vector<16x4xf32>
    %165 = tpu.matmul %1, %164, %cst_57 {dimension_numbers = #tpu.dot_dimension_numbers<[1], [0], [0], [1], [0, 0, 1, 1], [], []>} : vector<16x8xbf16>, vector<8x4xbf16>, vector<16x4xf32> -> vector<16x4xf32>
    %166 = arith.truncf %165 : vector<16x4xf32> to vector<16x4xbf16>
    %c0_58 = arith.constant 0 : index
    %c5 = arith.constant 5 : index
    %c0_59 = arith.constant 0 : index
    %c0_60 = arith.constant 0 : index
    %167 = vector.load %arg9[%c0_58, %c5, %c0_59, %c0_60] : memref<1x16x16x4xbf16, #tpu.memory_space<vmem>>, vector<1x1x16x4xbf16>
    %168 = vector.shape_cast %167 : vector<1x1x16x4xbf16> to vector<16x4xbf16>
    %169 = vector.shape_cast %166 : vector<16x4xbf16> to vector<1x1x16x4xbf16>
    tpu.vector_store %arg9[%c0_58, %c5, %c0_59, %c0_60], %169 {strides = array<i32>} : memref<1x16x16x4xbf16, #tpu.memory_space<vmem>>, vector<1x1x16x4xbf16>,
    %c6_i32 = arith.constant 6 : i32
    %170 = arith.addi %0, %c6_i32 : i32
    %171 = arith.index_cast %170 : i32 to index
    %172 = memref.load %arg5[%171] : memref<16xf32, #tpu.memory_space<smem>>
    %173 = arith.index_cast %170 : i32 to index
    %174 = memref.load %arg3[%173] : memref<16xi32, #tpu.memory_space<smem>>
    %c0_61 = arith.constant 0 : index
    %175 = arith.index_cast %174 : i32 to index
    %c0_62 = arith.constant 0 : index
    %c0_63 = arith.constant 0 : index
    %176 = vector.load %arg7[%c0_61, %175, %c0_62, %c0_63] : memref<1x8x8x4xbf16, #tpu.memory_space<vmem>>, vector<1x1x8x4xbf16>
    %177 = vector.shape_cast %176 : vector<1x1x8x4xbf16> to vector<8x4xbf16>
    %178 = arith.extf %177 : vector<8x4xbf16> to vector<8x4xf32>
    %179 = vector.broadcast %172 : f32 to vector<8x4xf32>
    %180 = arith.mulf %179, %178 : vector<8x4xf32>
    %181 = arith.index_cast %170 : i32 to index
    %182 = memref.load %arg6[%181] : memref<16xf32, #tpu.memory_space<smem>>
    %183 = arith.index_cast %170 : i32 to index
    %184 = memref.load %arg4[%183] : memref<16xi32, #tpu.memory_space<smem>>
    %c0_64 = arith.constant 0 : index
    %185 = arith.index_cast %184 : i32 to index
    %c0_65 = arith.constant 0 : index
    %c0_66 = arith.constant 0 : index
    %186 = vector.load %arg7[%c0_64, %185, %c0_65, %c0_66] : memref<1x8x8x4xbf16, #tpu.memory_space<vmem>>, vector<1x1x8x4xbf16>
    %187 = vector.shape_cast %186 : vector<1x1x8x4xbf16> to vector<8x4xbf16>
    %188 = arith.extf %187 : vector<8x4xbf16> to vector<8x4xf32>
    %189 = vector.broadcast %182 : f32 to vector<8x4xf32>
    %190 = arith.mulf %189, %188 : vector<8x4xf32>
    %191 = arith.addf %180, %190 : vector<8x4xf32>
    %192 = arith.truncf %191 : vector<8x4xf32> to vector<8x4xbf16>
    %cst_67 = arith.constant dense<0.000000e+00> : vector<16x4xf32>
    %193 = tpu.matmul %1, %192, %cst_67 {dimension_numbers = #tpu.dot_dimension_numbers<[1], [0], [0], [1], [0, 0, 1, 1], [], []>} : vector<16x8xbf16>, vector<8x4xbf16>, vector<16x4xf32> -> vector<16x4xf32>
    %194 = arith.truncf %193 : vector<16x4xf32> to vector<16x4xbf16>
    %c0_68 = arith.constant 0 : index
    %c6 = arith.constant 6 : index
    %c0_69 = arith.constant 0 : index
    %c0_70 = arith.constant 0 : index
    %195 = vector.load %arg9[%c0_68, %c6, %c0_69, %c0_70] : memref<1x16x16x4xbf16, #tpu.memory_space<vmem>>, vector<1x1x16x4xbf16>
    %196 = vector.shape_cast %195 : vector<1x1x16x4xbf16> to vector<16x4xbf16>
    %197 = vector.shape_cast %194 : vector<16x4xbf16> to vector<1x1x16x4xbf16>
    tpu.vector_store %arg9[%c0_68, %c6, %c0_69, %c0_70], %197 {strides = array<i32>} : memref<1x16x16x4xbf16, #tpu.memory_space<vmem>>, vector<1x1x16x4xbf16>,
    %c7_i32 = arith.constant 7 : i32
    %198 = arith.addi %0, %c7_i32 : i32
    %199 = arith.index_cast %198 : i32 to index
    %200 = memref.load %arg5[%199] : memref<16xf32, #tpu.memory_space<smem>>
    %201 = arith.index_cast %198 : i32 to index
    %202 = memref.load %arg3[%201] : memref<16xi32, #tpu.memory_space<smem>>
    %c0_71 = arith.constant 0 : index
    %203 = arith.index_cast %202 : i32 to index
    %c0_72 = arith.constant 0 : index
    %c0_73 = arith.constant 0 : index
    %204 = vector.load %arg7[%c0_71, %203, %c0_72, %c0_73] : memref<1x8x8x4xbf16, #tpu.memory_space<vmem>>, vector<1x1x8x4xbf16>
    %205 = vector.shape_cast %204 : vector<1x1x8x4xbf16> to vector<8x4xbf16>
    %206 = arith.extf %205 : vector<8x4xbf16> to vector<8x4xf32>
    %207 = vector.broadcast %200 : f32 to vector<8x4xf32>
    %208 = arith.mulf %207, %206 : vector<8x4xf32>
    %209 = arith.index_cast %198 : i32 to index
    %210 = memref.load %arg6[%209] : memref<16xf32, #tpu.memory_space<smem>>
    %211 = arith.index_cast %198 : i32 to index
    %212 = memref.load %arg4[%211] : memref<16xi32, #tpu.memory_space<smem>>
    %c0_74 = arith.constant 0 : index
    %213 = arith.index_cast %212 : i32 to index
    %c0_75 = arith.constant 0 : index
    %c0_76 = arith.constant 0 : index
    %214 = vector.load %arg7[%c0_74, %213, %c0_75, %c0_76] : memref<1x8x8x4xbf16, #tpu.memory_space<vmem>>, vector<1x1x8x4xbf16>
    %215 = vector.shape_cast %214 : vector<1x1x8x4xbf16> to vector<8x4xbf16>
    %216 = arith.extf %215 : vector<8x4xbf16> to vector<8x4xf32>
    %217 = vector.broadcast %210 : f32 to vector<8x4xf32>
    %218 = arith.mulf %217, %216 : vector<8x4xf32>
    %219 = arith.addf %208, %218 : vector<8x4xf32>
    %220 = arith.truncf %219 : vector<8x4xf32> to vector<8x4xbf16>
    %cst_77 = arith.constant dense<0.000000e+00> : vector<16x4xf32>
    %221 = tpu.matmul %1, %220, %cst_77 {dimension_numbers = #tpu.dot_dimension_numbers<[1], [0], [0], [1], [0, 0, 1, 1], [], []>} : vector<16x8xbf16>, vector<8x4xbf16>, vector<16x4xf32> -> vector<16x4xf32>
    %222 = arith.truncf %221 : vector<16x4xf32> to vector<16x4xbf16>
    %c0_78 = arith.constant 0 : index
    %c7 = arith.constant 7 : index
    %c0_79 = arith.constant 0 : index
    %c0_80 = arith.constant 0 : index
    %223 = vector.load %arg9[%c0_78, %c7, %c0_79, %c0_80] : memref<1x16x16x4xbf16, #tpu.memory_space<vmem>>, vector<1x1x16x4xbf16>
    %224 = vector.shape_cast %223 : vector<1x1x16x4xbf16> to vector<16x4xbf16>
    %225 = vector.shape_cast %222 : vector<16x4xbf16> to vector<1x1x16x4xbf16>
    tpu.vector_store %arg9[%c0_78, %c7, %c0_79, %c0_80], %225 {strides = array<i32>} : memref<1x16x16x4xbf16, #tpu.memory_space<vmem>>, vector<1x1x16x4xbf16>,
    %c8_i32 = arith.constant 8 : i32
    %226 = arith.addi %0, %c8_i32 : i32
    %227 = arith.index_cast %226 : i32 to index
    %228 = memref.load %arg5[%227] : memref<16xf32, #tpu.memory_space<smem>>
    %229 = arith.index_cast %226 : i32 to index
    %230 = memref.load %arg3[%229] : memref<16xi32, #tpu.memory_space<smem>>
    %c0_81 = arith.constant 0 : index
    %231 = arith.index_cast %230 : i32 to index
    %c0_82 = arith.constant 0 : index
    %c0_83 = arith.constant 0 : index
    %232 = vector.load %arg7[%c0_81, %231, %c0_82, %c0_83] : memref<1x8x8x4xbf16, #tpu.memory_space<vmem>>, vector<1x1x8x4xbf16>
    %233 = vector.shape_cast %232 : vector<1x1x8x4xbf16> to vector<8x4xbf16>
    %234 = arith.extf %233 : vector<8x4xbf16> to vector<8x4xf32>
    %235 = vector.broadcast %228 : f32 to vector<8x4xf32>
    %236 = arith.mulf %235, %234 : vector<8x4xf32>
    %237 = arith.index_cast %226 : i32 to index
    %238 = memref.load %arg6[%237] : memref<16xf32, #tpu.memory_space<smem>>
    %239 = arith.index_cast %226 : i32 to index
    %240 = memref.load %arg4[%239] : memref<16xi32, #tpu.memory_space<smem>>
    %c0_84 = arith.constant 0 : index
    %241 = arith.index_cast %240 : i32 to index
    %c0_85 = arith.constant 0 : index
    %c0_86 = arith.constant 0 : index
    %242 = vector.load %arg7[%c0_84, %241, %c0_85, %c0_86] : memref<1x8x8x4xbf16, #tpu.memory_space<vmem>>, vector<1x1x8x4xbf16>
    %243 = vector.shape_cast %242 : vector<1x1x8x4xbf16> to vector<8x4xbf16>
    %244 = arith.extf %243 : vector<8x4xbf16> to vector<8x4xf32>
    %245 = vector.broadcast %238 : f32 to vector<8x4xf32>
    %246 = arith.mulf %245, %244 : vector<8x4xf32>
    %247 = arith.addf %236, %246 : vector<8x4xf32>
    %248 = arith.truncf %247 : vector<8x4xf32> to vector<8x4xbf16>
    %cst_87 = arith.constant dense<0.000000e+00> : vector<16x4xf32>
    %249 = tpu.matmul %1, %248, %cst_87 {dimension_numbers = #tpu.dot_dimension_numbers<[1], [0], [0], [1], [0, 0, 1, 1], [], []>} : vector<16x8xbf16>, vector<8x4xbf16>, vector<16x4xf32> -> vector<16x4xf32>
    %250 = arith.truncf %249 : vector<16x4xf32> to vector<16x4xbf16>
    %c0_88 = arith.constant 0 : index
    %c8 = arith.constant 8 : index
    %c0_89 = arith.constant 0 : index
    %c0_90 = arith.constant 0 : index
    %251 = vector.load %arg9[%c0_88, %c8, %c0_89, %c0_90] : memref<1x16x16x4xbf16, #tpu.memory_space<vmem>>, vector<1x1x16x4xbf16>
    %252 = vector.shape_cast %251 : vector<1x1x16x4xbf16> to vector<16x4xbf16>
    %253 = vector.shape_cast %250 : vector<16x4xbf16> to vector<1x1x16x4xbf16>
    tpu.vector_store %arg9[%c0_88, %c8, %c0_89, %c0_90], %253 {strides = array<i32>} : memref<1x16x16x4xbf16, #tpu.memory_space<vmem>>, vector<1x1x16x4xbf16>,
    %c9_i32 = arith.constant 9 : i32
    %254 = arith.addi %0, %c9_i32 : i32
    %255 = arith.index_cast %254 : i32 to index
    %256 = memref.load %arg5[%255] : memref<16xf32, #tpu.memory_space<smem>>
    %257 = arith.index_cast %254 : i32 to index
    %258 = memref.load %arg3[%257] : memref<16xi32, #tpu.memory_space<smem>>
    %c0_91 = arith.constant 0 : index
    %259 = arith.index_cast %258 : i32 to index
    %c0_92 = arith.constant 0 : index
    %c0_93 = arith.constant 0 : index
    %260 = vector.load %arg7[%c0_91, %259, %c0_92, %c0_93] : memref<1x8x8x4xbf16, #tpu.memory_space<vmem>>, vector<1x1x8x4xbf16>
    %261 = vector.shape_cast %260 : vector<1x1x8x4xbf16> to vector<8x4xbf16>
    %262 = arith.extf %261 : vector<8x4xbf16> to vector<8x4xf32>
    %263 = vector.broadcast %256 : f32 to vector<8x4xf32>
    %264 = arith.mulf %263, %262 : vector<8x4xf32>
    %265 = arith.index_cast %254 : i32 to index
    %266 = memref.load %arg6[%265] : memref<16xf32, #tpu.memory_space<smem>>
    %267 = arith.index_cast %254 : i32 to index
    %268 = memref.load %arg4[%267] : memref<16xi32, #tpu.memory_space<smem>>
    %c0_94 = arith.constant 0 : index
    %269 = arith.index_cast %268 : i32 to index
    %c0_95 = arith.constant 0 : index
    %c0_96 = arith.constant 0 : index
    %270 = vector.load %arg7[%c0_94, %269, %c0_95, %c0_96] : memref<1x8x8x4xbf16, #tpu.memory_space<vmem>>, vector<1x1x8x4xbf16>
    %271 = vector.shape_cast %270 : vector<1x1x8x4xbf16> to vector<8x4xbf16>
    %272 = arith.extf %271 : vector<8x4xbf16> to vector<8x4xf32>
    %273 = vector.broadcast %266 : f32 to vector<8x4xf32>
    %274 = arith.mulf %273, %272 : vector<8x4xf32>
    %275 = arith.addf %264, %274 : vector<8x4xf32>
    %276 = arith.truncf %275 : vector<8x4xf32> to vector<8x4xbf16>
    %cst_97 = arith.constant dense<0.000000e+00> : vector<16x4xf32>
    %277 = tpu.matmul %1, %276, %cst_97 {dimension_numbers = #tpu.dot_dimension_numbers<[1], [0], [0], [1], [0, 0, 1, 1], [], []>} : vector<16x8xbf16>, vector<8x4xbf16>, vector<16x4xf32> -> vector<16x4xf32>
    %278 = arith.truncf %277 : vector<16x4xf32> to vector<16x4xbf16>
    %c0_98 = arith.constant 0 : index
    %c9 = arith.constant 9 : index
    %c0_99 = arith.constant 0 : index
    %c0_100 = arith.constant 0 : index
    %279 = vector.load %arg9[%c0_98, %c9, %c0_99, %c0_100] : memref<1x16x16x4xbf16, #tpu.memory_space<vmem>>, vector<1x1x16x4xbf16>
    %280 = vector.shape_cast %279 : vector<1x1x16x4xbf16> to vector<16x4xbf16>
    %281 = vector.shape_cast %278 : vector<16x4xbf16> to vector<1x1x16x4xbf16>
    tpu.vector_store %arg9[%c0_98, %c9, %c0_99, %c0_100], %281 {strides = array<i32>} : memref<1x16x16x4xbf16, #tpu.memory_space<vmem>>, vector<1x1x16x4xbf16>,
    %c10_i32 = arith.constant 10 : i32
    %282 = arith.addi %0, %c10_i32 : i32
    %283 = arith.index_cast %282 : i32 to index
    %284 = memref.load %arg5[%283] : memref<16xf32, #tpu.memory_space<smem>>
    %285 = arith.index_cast %282 : i32 to index
    %286 = memref.load %arg3[%285] : memref<16xi32, #tpu.memory_space<smem>>
    %c0_101 = arith.constant 0 : index
    %287 = arith.index_cast %286 : i32 to index
    %c0_102 = arith.constant 0 : index
    %c0_103 = arith.constant 0 : index
    %288 = vector.load %arg7[%c0_101, %287, %c0_102, %c0_103] : memref<1x8x8x4xbf16, #tpu.memory_space<vmem>>, vector<1x1x8x4xbf16>
    %289 = vector.shape_cast %288 : vector<1x1x8x4xbf16> to vector<8x4xbf16>
    %290 = arith.extf %289 : vector<8x4xbf16> to vector<8x4xf32>
    %291 = vector.broadcast %284 : f32 to vector<8x4xf32>
    %292 = arith.mulf %291, %290 : vector<8x4xf32>
    %293 = arith.index_cast %282 : i32 to index
    %294 = memref.load %arg6[%293] : memref<16xf32, #tpu.memory_space<smem>>
    %295 = arith.index_cast %282 : i32 to index
    %296 = memref.load %arg4[%295] : memref<16xi32, #tpu.memory_space<smem>>
    %c0_104 = arith.constant 0 : index
    %297 = arith.index_cast %296 : i32 to index
    %c0_105 = arith.constant 0 : index
    %c0_106 = arith.constant 0 : index
    %298 = vector.load %arg7[%c0_104, %297, %c0_105, %c0_106] : memref<1x8x8x4xbf16, #tpu.memory_space<vmem>>, vector<1x1x8x4xbf16>
    %299 = vector.shape_cast %298 : vector<1x1x8x4xbf16> to vector<8x4xbf16>
    %300 = arith.extf %299 : vector<8x4xbf16> to vector<8x4xf32>
    %301 = vector.broadcast %294 : f32 to vector<8x4xf32>
    %302 = arith.mulf %301, %300 : vector<8x4xf32>
    %303 = arith.addf %292, %302 : vector<8x4xf32>
    %304 = arith.truncf %303 : vector<8x4xf32> to vector<8x4xbf16>
    %cst_107 = arith.constant dense<0.000000e+00> : vector<16x4xf32>
    %305 = tpu.matmul %1, %304, %cst_107 {dimension_numbers = #tpu.dot_dimension_numbers<[1], [0], [0], [1], [0, 0, 1, 1], [], []>} : vector<16x8xbf16>, vector<8x4xbf16>, vector<16x4xf32> -> vector<16x4xf32>
    %306 = arith.truncf %305 : vector<16x4xf32> to vector<16x4xbf16>
    %c0_108 = arith.constant 0 : index
    %c10 = arith.constant 10 : index
    %c0_109 = arith.constant 0 : index
    %c0_110 = arith.constant 0 : index
    %307 = vector.load %arg9[%c0_108, %c10, %c0_109, %c0_110] : memref<1x16x16x4xbf16, #tpu.memory_space<vmem>>, vector<1x1x16x4xbf16>
    %308 = vector.shape_cast %307 : vector<1x1x16x4xbf16> to vector<16x4xbf16>
    %309 = vector.shape_cast %306 : vector<16x4xbf16> to vector<1x1x16x4xbf16>
    tpu.vector_store %arg9[%c0_108, %c10, %c0_109, %c0_110], %309 {strides = array<i32>} : memref<1x16x16x4xbf16, #tpu.memory_space<vmem>>, vector<1x1x16x4xbf16>,
    %c11_i32 = arith.constant 11 : i32
    %310 = arith.addi %0, %c11_i32 : i32
    %311 = arith.index_cast %310 : i32 to index
    %312 = memref.load %arg5[%311] : memref<16xf32, #tpu.memory_space<smem>>
    %313 = arith.index_cast %310 : i32 to index
    %314 = memref.load %arg3[%313] : memref<16xi32, #tpu.memory_space<smem>>
    %c0_111 = arith.constant 0 : index
    %315 = arith.index_cast %314 : i32 to index
    %c0_112 = arith.constant 0 : index
    %c0_113 = arith.constant 0 : index
    %316 = vector.load %arg7[%c0_111, %315, %c0_112, %c0_113] : memref<1x8x8x4xbf16, #tpu.memory_space<vmem>>, vector<1x1x8x4xbf16>
    %317 = vector.shape_cast %316 : vector<1x1x8x4xbf16> to vector<8x4xbf16>
    %318 = arith.extf %317 : vector<8x4xbf16> to vector<8x4xf32>
    %319 = vector.broadcast %312 : f32 to vector<8x4xf32>
    %320 = arith.mulf %319, %318 : vector<8x4xf32>
    %321 = arith.index_cast %310 : i32 to index
    %322 = memref.load %arg6[%321] : memref<16xf32, #tpu.memory_space<smem>>
    %323 = arith.index_cast %310 : i32 to index
    %324 = memref.load %arg4[%323] : memref<16xi32, #tpu.memory_space<smem>>
    %c0_114 = arith.constant 0 : index
    %325 = arith.index_cast %324 : i32 to index
    %c0_115 = arith.constant 0 : index
    %c0_116 = arith.constant 0 : index
    %326 = vector.load %arg7[%c0_114, %325, %c0_115, %c0_116] : memref<1x8x8x4xbf16, #tpu.memory_space<vmem>>, vector<1x1x8x4xbf16>
    %327 = vector.shape_cast %326 : vector<1x1x8x4xbf16> to vector<8x4xbf16>
    %328 = arith.extf %327 : vector<8x4xbf16> to vector<8x4xf32>
    %329 = vector.broadcast %322 : f32 to vector<8x4xf32>
    %330 = arith.mulf %329, %328 : vector<8x4xf32>
    %331 = arith.addf %320, %330 : vector<8x4xf32>
    %332 = arith.truncf %331 : vector<8x4xf32> to vector<8x4xbf16>
    %cst_117 = arith.constant dense<0.000000e+00> : vector<16x4xf32>
    %333 = tpu.matmul %1, %332, %cst_117 {dimension_numbers = #tpu.dot_dimension_numbers<[1], [0], [0], [1], [0, 0, 1, 1], [], []>} : vector<16x8xbf16>, vector<8x4xbf16>, vector<16x4xf32> -> vector<16x4xf32>
    %334 = arith.truncf %333 : vector<16x4xf32> to vector<16x4xbf16>
    %c0_118 = arith.constant 0 : index
    %c11 = arith.constant 11 : index
    %c0_119 = arith.constant 0 : index
    %c0_120 = arith.constant 0 : index
    %335 = vector.load %arg9[%c0_118, %c11, %c0_119, %c0_120] : memref<1x16x16x4xbf16, #tpu.memory_space<vmem>>, vector<1x1x16x4xbf16>
    %336 = vector.shape_cast %335 : vector<1x1x16x4xbf16> to vector<16x4xbf16>
    %337 = vector.shape_cast %334 : vector<16x4xbf16> to vector<1x1x16x4xbf16>
    tpu.vector_store %arg9[%c0_118, %c11, %c0_119, %c0_120], %337 {strides = array<i32>} : memref<1x16x16x4xbf16, #tpu.memory_space<vmem>>, vector<1x1x16x4xbf16>,
    %c12_i32 = arith.constant 12 : i32
    %338 = arith.addi %0, %c12_i32 : i32
    %339 = arith.index_cast %338 : i32 to index
    %340 = memref.load %arg5[%339] : memref<16xf32, #tpu.memory_space<smem>>
    %341 = arith.index_cast %338 : i32 to index
    %342 = memref.load %arg3[%341] : memref<16xi32, #tpu.memory_space<smem>>
    %c0_121 = arith.constant 0 : index
    %343 = arith.index_cast %342 : i32 to index
    %c0_122 = arith.constant 0 : index
    %c0_123 = arith.constant 0 : index
    %344 = vector.load %arg7[%c0_121, %343, %c0_122, %c0_123] : memref<1x8x8x4xbf16, #tpu.memory_space<vmem>>, vector<1x1x8x4xbf16>
    %345 = vector.shape_cast %344 : vector<1x1x8x4xbf16> to vector<8x4xbf16>
    %346 = arith.extf %345 : vector<8x4xbf16> to vector<8x4xf32>
    %347 = vector.broadcast %340 : f32 to vector<8x4xf32>
    %348 = arith.mulf %347, %346 : vector<8x4xf32>
    %349 = arith.index_cast %338 : i32 to index
    %350 = memref.load %arg6[%349] : memref<16xf32, #tpu.memory_space<smem>>
    %351 = arith.index_cast %338 : i32 to index
    %352 = memref.load %arg4[%351] : memref<16xi32, #tpu.memory_space<smem>>
    %c0_124 = arith.constant 0 : index
    %353 = arith.index_cast %352 : i32 to index
    %c0_125 = arith.constant 0 : index
    %c0_126 = arith.constant 0 : index
    %354 = vector.load %arg7[%c0_124, %353, %c0_125, %c0_126] : memref<1x8x8x4xbf16, #tpu.memory_space<vmem>>, vector<1x1x8x4xbf16>
    %355 = vector.shape_cast %354 : vector<1x1x8x4xbf16> to vector<8x4xbf16>
    %356 = arith.extf %355 : vector<8x4xbf16> to vector<8x4xf32>
    %357 = vector.broadcast %350 : f32 to vector<8x4xf32>
    %358 = arith.mulf %357, %356 : vector<8x4xf32>
    %359 = arith.addf %348, %358 : vector<8x4xf32>
    %360 = arith.truncf %359 : vector<8x4xf32> to vector<8x4xbf16>
    %cst_127 = arith.constant dense<0.000000e+00> : vector<16x4xf32>
    %361 = tpu.matmul %1, %360, %cst_127 {dimension_numbers = #tpu.dot_dimension_numbers<[1], [0], [0], [1], [0, 0, 1, 1], [], []>} : vector<16x8xbf16>, vector<8x4xbf16>, vector<16x4xf32> -> vector<16x4xf32>
    %362 = arith.truncf %361 : vector<16x4xf32> to vector<16x4xbf16>
    %c0_128 = arith.constant 0 : index
    %c12 = arith.constant 12 : index
    %c0_129 = arith.constant 0 : index
    %c0_130 = arith.constant 0 : index
    %363 = vector.load %arg9[%c0_128, %c12, %c0_129, %c0_130] : memref<1x16x16x4xbf16, #tpu.memory_space<vmem>>, vector<1x1x16x4xbf16>
    %364 = vector.shape_cast %363 : vector<1x1x16x4xbf16> to vector<16x4xbf16>
    %365 = vector.shape_cast %362 : vector<16x4xbf16> to vector<1x1x16x4xbf16>
    tpu.vector_store %arg9[%c0_128, %c12, %c0_129, %c0_130], %365 {strides = array<i32>} : memref<1x16x16x4xbf16, #tpu.memory_space<vmem>>, vector<1x1x16x4xbf16>,
    %c13_i32 = arith.constant 13 : i32
    %366 = arith.addi %0, %c13_i32 : i32
    %367 = arith.index_cast %366 : i32 to index
    %368 = memref.load %arg5[%367] : memref<16xf32, #tpu.memory_space<smem>>
    %369 = arith.index_cast %366 : i32 to index
    %370 = memref.load %arg3[%369] : memref<16xi32, #tpu.memory_space<smem>>
    %c0_131 = arith.constant 0 : index
    %371 = arith.index_cast %370 : i32 to index
    %c0_132 = arith.constant 0 : index
    %c0_133 = arith.constant 0 : index
    %372 = vector.load %arg7[%c0_131, %371, %c0_132, %c0_133] : memref<1x8x8x4xbf16, #tpu.memory_space<vmem>>, vector<1x1x8x4xbf16>
    %373 = vector.shape_cast %372 : vector<1x1x8x4xbf16> to vector<8x4xbf16>
    %374 = arith.extf %373 : vector<8x4xbf16> to vector<8x4xf32>
    %375 = vector.broadcast %368 : f32 to vector<8x4xf32>
    %376 = arith.mulf %375, %374 : vector<8x4xf32>
    %377 = arith.index_cast %366 : i32 to index
    %378 = memref.load %arg6[%377] : memref<16xf32, #tpu.memory_space<smem>>
    %379 = arith.index_cast %366 : i32 to index
    %380 = memref.load %arg4[%379] : memref<16xi32, #tpu.memory_space<smem>>
    %c0_134 = arith.constant 0 : index
    %381 = arith.index_cast %380 : i32 to index
    %c0_135 = arith.constant 0 : index
    %c0_136 = arith.constant 0 : index
    %382 = vector.load %arg7[%c0_134, %381, %c0_135, %c0_136] : memref<1x8x8x4xbf16, #tpu.memory_space<vmem>>, vector<1x1x8x4xbf16>
    %383 = vector.shape_cast %382 : vector<1x1x8x4xbf16> to vector<8x4xbf16>
    %384 = arith.extf %383 : vector<8x4xbf16> to vector<8x4xf32>
    %385 = vector.broadcast %378 : f32 to vector<8x4xf32>
    %386 = arith.mulf %385, %384 : vector<8x4xf32>
    %387 = arith.addf %376, %386 : vector<8x4xf32>
    %388 = arith.truncf %387 : vector<8x4xf32> to vector<8x4xbf16>
    %cst_137 = arith.constant dense<0.000000e+00> : vector<16x4xf32>
    %389 = tpu.matmul %1, %388, %cst_137 {dimension_numbers = #tpu.dot_dimension_numbers<[1], [0], [0], [1], [0, 0, 1, 1], [], []>} : vector<16x8xbf16>, vector<8x4xbf16>, vector<16x4xf32> -> vector<16x4xf32>
    %390 = arith.truncf %389 : vector<16x4xf32> to vector<16x4xbf16>
    %c0_138 = arith.constant 0 : index
    %c13 = arith.constant 13 : index
    %c0_139 = arith.constant 0 : index
    %c0_140 = arith.constant 0 : index
    %391 = vector.load %arg9[%c0_138, %c13, %c0_139, %c0_140] : memref<1x16x16x4xbf16, #tpu.memory_space<vmem>>, vector<1x1x16x4xbf16>
    %392 = vector.shape_cast %391 : vector<1x1x16x4xbf16> to vector<16x4xbf16>
    %393 = vector.shape_cast %390 : vector<16x4xbf16> to vector<1x1x16x4xbf16>
    tpu.vector_store %arg9[%c0_138, %c13, %c0_139, %c0_140], %393 {strides = array<i32>} : memref<1x16x16x4xbf16, #tpu.memory_space<vmem>>, vector<1x1x16x4xbf16>,
    %c14_i32 = arith.constant 14 : i32
    %394 = arith.addi %0, %c14_i32 : i32
    %395 = arith.index_cast %394 : i32 to index
    %396 = memref.load %arg5[%395] : memref<16xf32, #tpu.memory_space<smem>>
    %397 = arith.index_cast %394 : i32 to index
    %398 = memref.load %arg3[%397] : memref<16xi32, #tpu.memory_space<smem>>
    %c0_141 = arith.constant 0 : index
    %399 = arith.index_cast %398 : i32 to index
    %c0_142 = arith.constant 0 : index
    %c0_143 = arith.constant 0 : index
    %400 = vector.load %arg7[%c0_141, %399, %c0_142, %c0_143] : memref<1x8x8x4xbf16, #tpu.memory_space<vmem>>, vector<1x1x8x4xbf16>
    %401 = vector.shape_cast %400 : vector<1x1x8x4xbf16> to vector<8x4xbf16>
    %402 = arith.extf %401 : vector<8x4xbf16> to vector<8x4xf32>
    %403 = vector.broadcast %396 : f32 to vector<8x4xf32>
    %404 = arith.mulf %403, %402 : vector<8x4xf32>
    %405 = arith.index_cast %394 : i32 to index
    %406 = memref.load %arg6[%405] : memref<16xf32, #tpu.memory_space<smem>>
    %407 = arith.index_cast %394 : i32 to index
    %408 = memref.load %arg4[%407] : memref<16xi32, #tpu.memory_space<smem>>
    %c0_144 = arith.constant 0 : index
    %409 = arith.index_cast %408 : i32 to index
    %c0_145 = arith.constant 0 : index
    %c0_146 = arith.constant 0 : index
    %410 = vector.load %arg7[%c0_144, %409, %c0_145, %c0_146] : memref<1x8x8x4xbf16, #tpu.memory_space<vmem>>, vector<1x1x8x4xbf16>
    %411 = vector.shape_cast %410 : vector<1x1x8x4xbf16> to vector<8x4xbf16>
    %412 = arith.extf %411 : vector<8x4xbf16> to vector<8x4xf32>
    %413 = vector.broadcast %406 : f32 to vector<8x4xf32>
    %414 = arith.mulf %413, %412 : vector<8x4xf32>
    %415 = arith.addf %404, %414 : vector<8x4xf32>
    %416 = arith.truncf %415 : vector<8x4xf32> to vector<8x4xbf16>
    %cst_147 = arith.constant dense<0.000000e+00> : vector<16x4xf32>
    %417 = tpu.matmul %1, %416, %cst_147 {dimension_numbers = #tpu.dot_dimension_numbers<[1], [0], [0], [1], [0, 0, 1, 1], [], []>} : vector<16x8xbf16>, vector<8x4xbf16>, vector<16x4xf32> -> vector<16x4xf32>
    %418 = arith.truncf %417 : vector<16x4xf32> to vector<16x4xbf16>
    %c0_148 = arith.constant 0 : index
    %c14 = arith.constant 14 : index
    %c0_149 = arith.constant 0 : index
    %c0_150 = arith.constant 0 : index
    %419 = vector.load %arg9[%c0_148, %c14, %c0_149, %c0_150] : memref<1x16x16x4xbf16, #tpu.memory_space<vmem>>, vector<1x1x16x4xbf16>
    %420 = vector.shape_cast %419 : vector<1x1x16x4xbf16> to vector<16x4xbf16>
    %421 = vector.shape_cast %418 : vector<16x4xbf16> to vector<1x1x16x4xbf16>
    tpu.vector_store %arg9[%c0_148, %c14, %c0_149, %c0_150], %421 {strides = array<i32>} : memref<1x16x16x4xbf16, #tpu.memory_space<vmem>>, vector<1x1x16x4xbf16>,
    %c15_i32 = arith.constant 15 : i32
    %422 = arith.addi %0, %c15_i32 : i32
    %423 = arith.index_cast %422 : i32 to index
    %424 = memref.load %arg5[%423] : memref<16xf32, #tpu.memory_space<smem>>
    %425 = arith.index_cast %422 : i32 to index
    %426 = memref.load %arg3[%425] : memref<16xi32, #tpu.memory_space<smem>>
    %c0_151 = arith.constant 0 : index
    %427 = arith.index_cast %426 : i32 to index
    %c0_152 = arith.constant 0 : index
    %c0_153 = arith.constant 0 : index
    %428 = vector.load %arg7[%c0_151, %427, %c0_152, %c0_153] : memref<1x8x8x4xbf16, #tpu.memory_space<vmem>>, vector<1x1x8x4xbf16>
    %429 = vector.shape_cast %428 : vector<1x1x8x4xbf16> to vector<8x4xbf16>
    %430 = arith.extf %429 : vector<8x4xbf16> to vector<8x4xf32>
    %431 = vector.broadcast %424 : f32 to vector<8x4xf32>
    %432 = arith.mulf %431, %430 : vector<8x4xf32>
    %433 = arith.index_cast %422 : i32 to index
    %434 = memref.load %arg6[%433] : memref<16xf32, #tpu.memory_space<smem>>
    %435 = arith.index_cast %422 : i32 to index
    %436 = memref.load %arg4[%435] : memref<16xi32, #tpu.memory_space<smem>>
    %c0_154 = arith.constant 0 : index
    %437 = arith.index_cast %436 : i32 to index
    %c0_155 = arith.constant 0 : index
    %c0_156 = arith.constant 0 : index
    %438 = vector.load %arg7[%c0_154, %437, %c0_155, %c0_156] : memref<1x8x8x4xbf16, #tpu.memory_space<vmem>>, vector<1x1x8x4xbf16>
    %439 = vector.shape_cast %438 : vector<1x1x8x4xbf16> to vector<8x4xbf16>
    %440 = arith.extf %439 : vector<8x4xbf16> to vector<8x4xf32>
    %441 = vector.broadcast %434 : f32 to vector<8x4xf32>
    %442 = arith.mulf %441, %440 : vector<8x4xf32>
    %443 = arith.addf %432, %442 : vector<8x4xf32>
    %444 = arith.truncf %443 : vector<8x4xf32> to vector<8x4xbf16>
    %cst_157 = arith.constant dense<0.000000e+00> : vector<16x4xf32>
    %445 = tpu.matmul %1, %444, %cst_157 {dimension_numbers = #tpu.dot_dimension_numbers<[1], [0], [0], [1], [0, 0, 1, 1], [], []>} : vector<16x8xbf16>, vector<8x4xbf16>, vector<16x4xf32> -> vector<16x4xf32>
    %446 = arith.truncf %445 : vector<16x4xf32> to vector<16x4xbf16>
    %c0_158 = arith.constant 0 : index
    %c15 = arith.constant 15 : index
    %c0_159 = arith.constant 0 : index
    %c0_160 = arith.constant 0 : index
    %447 = vector.load %arg9[%c0_158, %c15, %c0_159, %c0_160] : memref<1x16x16x4xbf16, #tpu.memory_space<vmem>>, vector<1x1x16x4xbf16>
    %448 = vector.shape_cast %447 : vector<1x1x16x4xbf16> to vector<16x4xbf16>
    %449 = vector.shape_cast %446 : vector<16x4xbf16> to vector<1x1x16x4xbf16>
    tpu.vector_store %arg9[%c0_158, %c15, %c0_159, %c0_160], %449 {strides = array<i32>} : memref<1x16x16x4xbf16, #tpu.memory_space<vmem>>, vector<1x1x16x4xbf16>,
    return
  }
  func.func @transform_0(%arg0: i32, %arg1: i32, %arg2: i32) -> i32 {
    %c0_i32 = arith.constant 0 : i32
    %c0_i32_0 = arith.constant 0 : i32
    return %c0_i32 : i32
  }
  func.func @transform_1(%arg0: i32, %arg1: i32, %arg2: i32) -> i32 {
    %c0_i32 = arith.constant 0 : i32
    %c0_i32_0 = arith.constant 0 : i32
    return %c0_i32 : i32
  }
  func.func @transform_2(%arg0: i32, %arg1: i32, %arg2: i32) -> i32 {
    %c0_i32 = arith.constant 0 : i32
    %c0_i32_0 = arith.constant 0 : i32
    return %c0_i32 : i32
  }
  func.func @transform_3(%arg0: i32, %arg1: i32, %arg2: i32) -> i32 {
    %c0_i32 = arith.constant 0 : i32
    %c0_i32_0 = arith.constant 0 : i32
    return %c0_i32 : i32
  }
  func.func @transform_4(%arg0: i32, %arg1: i32, %arg2: i32) -> (i32, i32, i32, i32) {
    %c0_i32 = arith.constant 0 : i32
    %c0_i32_0 = arith.constant 0 : i32
    %c0_i32_1 = arith.constant 0 : i32
    return %arg0, %c0_i32, %c0_i32_0, %arg1 : i32, i32, i32, i32
  }
  func.func @transform_5(%arg0: i32, %arg1: i32, %arg2: i32) -> (i32, i32) {
    %c0_i32 = arith.constant 0 : i32
    %c0_i32_0 = arith.constant 0 : i32
    %c0_i32_1 = arith.constant 0 : i32
    return %c0_i32, %c0_i32_0 : i32, i32
  }
  func.func @transform_6(%arg0: i32, %arg1: i32, %arg2: i32) -> (i32, i32, i32, i32) {
    %c0_i32 = arith.constant 0 : i32
    %c0_i32_0 = arith.constant 0 : i32
    return %arg0, %arg2, %c0_i32, %arg1 : i32, i32, i32, i32
  }
}

</mosaic_0001>

<llo_original>
// kernel: tpu_custom_call.1
$region0: #{tpu_custom_call.1}
  #allocation0 [shape = 'u32[]', space=smem, size = 0x4, offset = 0x4, fixed_abs, tag = 'smem constant byte address 0x4 - core index']
  #allocation1 [shape = 'u32[144,128]{1,0:T(1,128)}', space=vmem, size = 0x12000, scoped, tag = 'internal scratch']
  %s0 = inlined_call_operand.vmem [shape: s32[16], index: 0, kind: input, shape index: {}]
  %s1 = inlined_call_operand.vmem [shape: s32[16], index: 1, kind: input, shape index: {}]
  %s2 = inlined_call_operand.vmem [shape: f32[16], index: 2, kind: input, shape index: {}]
  %s3 = inlined_call_operand.vmem [shape: f32[16], index: 3, kind: input, shape index: {}]
  %s4 = inlined_call_operand.vmem [shape: bf16[2,8,8,4], index: 4, kind: input, shape index: {}]
  %s5 = inlined_call_operand.vmem [shape: bf16[16,8], index: 5, kind: input, shape index: {}]
  %s6 = inlined_call_operand.vmem [shape: bf16[2,16,16,4], index: 6, kind: output, shape index: {}]
  %s7 = sld [smem:[#allocation0]]
  $region73: #{tpu_custom_call.1} parent=0
    _
  %s9 = ssub.s32 1, %s7
  %s10 = scalar_select 0, %s9, %s7
  $region1: #{tpu_custom_call.1} parent=0
    #allocation2 [shape = 'u8[512]{0}', space=smem, size = 0x200, scoped, tag = 'input window, operand 0, single buffered']
    #allocation3 [shape = 's32[2]{0}', space=sflag, size = 0x8, scoped, tag = 'scoped memory for tpu_custom_call.1']
    #allocation4 [shape = 'u8[512]{0}', space=smem, size = 0x200, scoped, tag = 'input window, operand 1, single buffered']
    #allocation5 [shape = 's32[1]{0}', space=sflag, size = 0x4, scoped, tag = 'scoped memory for tpu_custom_call.1']
    #allocation6 [shape = 'u8[512]{0}', space=smem, size = 0x200, scoped, tag = 'input window, operand 2, single buffered']
    #allocation7 [shape = 'u8[512]{0}', space=smem, size = 0x200, scoped, tag = 'input window, operand 3, single buffered']
    #allocation8 [shape = 's32[1]{0}', space=sflag, size = 0x4, scoped, tag = 'scoped memory for tpu_custom_call.1']
    %11 = vsyncpa [#allocation3], 0
    %12 = vsyncpa [#allocation5], 0
    %13 = vsyncpa [#allocation8], 0
    loop: start=0, step=1, limit=4
    $region2: #{tpu_custom_call.1} parent=1 // loop_pre_header
      _
    $region3: #{tpu_custom_call.1} parent=1 // loop_header
      %s15 = sphi 0, %s19
      %p16 = scmp.ge.s32.totalorder %s15, 4
      %s22 = sphi 0, %s41
      %s23 = sphi 0, %s37
      %s24 = sphi 0, %s33
      %s25 = sphi 0, %s22
      %s26 = sphi 0, %s23
      %s27 = sphi 0, %s24
      %s28 = sphi 0, %s25
      %s29 = sphi 0, %s26
      %s30 = sphi 0, %s27
      %s42 = sphi 0, %s42
      %s44 = sphi 0, %s42
      %s45 = sphi 0, %s44
      %s59 = sphi 0, %s45
      %s63 = sphi 0, %s63
      %s65 = sphi 0, %s63
      %s66 = sphi 0, %s65
      %s80 = sphi 0, %s66
      %s84 = sphi 0, %s84
      %s86 = sphi 0, %s84
      %s87 = sphi 0, %s86
      %s101 = sphi 0, %s87
      %s105 = sphi 0, %s105
      %s107 = sphi 0, %s105
      %s108 = sphi 0, %s107
      %s122 = sphi 0, %s108
      %s130 = sphi 0, %s132
      %s133 = sphi 0, %s130
      %s134 = sphi 0, %s133
      %s150 = sphi 0, %s134
      %s154 = sphi 0, %s154
      %s156 = sphi 0, %s154
      %s157 = sphi 0, %s156
      %s171 = sphi 0, %s157
      %s181 = sphi 0, %s183
      %s184 = sphi 0, %s181
      %s185 = sphi 0, %s184
      %s201 = sphi 0, %s185
    $region4: #{tpu_custom_call.1} parent=1 // loop_header_branch
      %18 = sbr.rel (%p16) target = $region8
    $region5: #{tpu_custom_call.1} parent=1 // loop_body
      %s20 = ssub.s32 %s15, 1
      %s21 = ssub.s32 %s15, 2
      %s31 = sadd.s32 1, %s24
      %p32 = scmp.ge.s32.totalorder %s31, 1
      %s33 = scalar_select %p32, 0, %s31
      %s34 = sadd.s32 1, %s23
      %s35 = scalar_select %p32, %s34, %s23
      %p36 = scmp.ge.s32.totalorder %s35, 1
      %s37 = scalar_select %p36, 0, %s35
      %s38 = sadd.s32 1, %s22
      %s39 = scalar_select %p36, %s38, %s22
      %p40 = scmp.ge.s32.totalorder %s39, 2
      %s41 = scalar_select %p40, 0, %s39
      %s43 = sadd.s32 %s42, 1
      %p46 = scmp.eq.s32.totalorder %s15, 1
      %p47 = scmp.ne.s32.totalorder %s42, %s44
      %p48 = scmp.eq.s32.totalorder %s15, 0
      %p49 = por %p47, %p48
      %p50 = scmp.ne.s32.totalorder %s42, %s44
      %p51 = scmp.eq.s32.totalorder %s20, 1
      %p52 = por %p50, %p51
      %p53 = scmp.ne.s32.totalorder %s44, %s45
      %p54 = scmp.eq.s32.totalorder %s20, 0
      %p55 = por %p53, %p54
      %p56 = scmp.ne.s32.totalorder %s44, %s45
      %p57 = scmp.eq.s32.totalorder %s21, 1
      %p58 = por %p56, %p57
      %p60 = scmp.ne.s32.totalorder %s45, %s59
      %p61 = scmp.eq.s32.totalorder %s21, 0
      %p62 = por %p60, %p61
      %s64 = sadd.s32 %s63, 1
      %p67 = scmp.eq.s32.totalorder %s15, 1
      %p68 = scmp.ne.s32.totalorder %s63, %s65
      %p69 = scmp.eq.s32.totalorder %s15, 0
      %p70 = por %p68, %p69
      %p71 = scmp.ne.s32.totalorder %s63, %s65
      %p72 = scmp.eq.s32.totalorder %s20, 1
      %p73 = por %p71, %p72
      %p74 = scmp.ne.s32.totalorder %s65, %s66
      %p75 = scmp.eq.s32.totalorder %s20, 0
      %p76 = por %p74, %p75
      %p77 = scmp.ne.s32.totalorder %s65, %s66
      %p78 = scmp.eq.s32.totalorder %s21, 1
      %p79 = por %p77, %p78
      %p81 = scmp.ne.s32.totalorder %s66, %s80
      %p82 = scmp.eq.s32.totalorder %s21, 0
      %p83 = por %p81, %p82
      %s85 = sadd.s32 %s84, 1
      %p88 = scmp.eq.s32.totalorder %s15, 1
      %p89 = scmp.ne.s32.totalorder %s84, %s86
      %p90 = scmp.eq.s32.totalorder %s15, 0
      %p91 = por %p89, %p90
      %p92 = scmp.ne.s32.totalorder %s84, %s86
      %p93 = scmp.eq.s32.totalorder %s20, 1
      %p94 = por %p92, %p93
      %p95 = scmp.ne.s32.totalorder %s86, %s87
      %p96 = scmp.eq.s32.totalorder %s20, 0
      %p97 = por %p95, %p96
      %p98 = scmp.ne.s32.totalorder %s86, %s87
      %p99 = scmp.eq.s32.totalorder %s21, 1
      %p100 = por %p98, %p99
      %p102 = scmp.ne.s32.totalorder %s87, %s101
      %p103 = scmp.eq.s32.totalorder %s21, 0
      %p104 = por %p102, %p103
      %s106 = sadd.s32 %s105, 1
      %p109 = scmp.eq.s32.totalorder %s15, 1
      %p110 = scmp.ne.s32.totalorder %s105, %s107
      %p111 = scmp.eq.s32.totalorder %s15, 0
      %p112 = por %p110, %p111
      %p113 = scmp.ne.s32.totalorder %s105, %s107
      %p114 = scmp.eq.s32.totalorder %s20, 1
      %p115 = por %p113, %p114
      %p116 = scmp.ne.s32.totalorder %s107, %s108
      %p117 = scmp.eq.s32.totalorder %s20, 0
      %p118 = por %p116, %p117
      %p119 = scmp.ne.s32.totalorder %s107, %s108
      %p120 = scmp.eq.s32.totalorder %s21, 1
      %p121 = por %p119, %p120
      %p123 = scmp.ne.s32.totalorder %s108, %s122
      %p124 = scmp.eq.s32.totalorder %s21, 0
      %p125 = por %p123, %p124
      %s126 = ssub.s32 %s22, %s41
      %s127 = ssub.s32 %s23, %s37
      %s128 = sor.u32 %s126, %s127
      %p129 = scmp.eq.s32.totalorder %s128, 0
      %s131 = sadd.s32 %s130, 1
      %s132 = scalar_select %p129, %s130, %s131
      %p135 = pneg %p129
      %p136 = scmp.eq.s32.totalorder %s15, 1
      %p137 = por %p135, %p136
      %p138 = scmp.ne.s32.totalorder %s130, %s133
      %p139 = scmp.eq.s32.totalorder %s15, 0
      %p140 = por %p138, %p139
      %p141 = scmp.ne.s32.totalorder %s130, %s133
      %p142 = scmp.eq.s32.totalorder %s20, 1
      %p143 = por %p141, %p142
      %p144 = scmp.ne.s32.totalorder %s133, %s134
      %p145 = scmp.eq.s32.totalorder %s20, 0
      %p146 = por %p144, %p145
      %p147 = scmp.ne.s32.totalorder %s133, %s134
      %p148 = scmp.eq.s32.totalorder %s21, 1
      %p149 = por %p147, %p148
      %p151 = scmp.ne.s32.totalorder %s134, %s150
      %p152 = scmp.eq.s32.totalorder %s21, 0
      %p153 = por %p151, %p152
      %s155 = sadd.s32 %s154, 1
      %p158 = scmp.eq.s32.totalorder %s15, 1
      %p159 = scmp.ne.s32.totalorder %s154, %s156
      %p160 = scmp.eq.s32.totalorder %s15, 0
      %p161 = por %p159, %p160
      %p162 = scmp.ne.s32.totalorder %s154, %s156
      %p163 = scmp.eq.s32.totalorder %s20, 1
      %p164 = por %p162, %p163
      %p165 = scmp.ne.s32.totalorder %s156, %s157
      %p166 = scmp.eq.s32.totalorder %s20, 0
      %p167 = por %p165, %p166
      %p168 = scmp.ne.s32.totalorder %s156, %s157
      %p169 = scmp.eq.s32.totalorder %s21, 1
      %p170 = por %p168, %p169
      %p172 = scmp.ne.s32.totalorder %s157, %s171
      %p173 = scmp.eq.s32.totalorder %s21, 0
      %p174 = por %p172, %p173
      %s175 = ssub.s32 %s22, %s41
      %s176 = ssub.s32 %s24, %s33
      %s177 = sor.u32 %s175, %s176
      %s178 = ssub.s32 %s23, %s37
      %s179 = sor.u32 %s177, %s178
      %p180 = scmp.eq.s32.totalorder %s179, 0
      %s182 = sadd.s32 %s181, 1
      %s183 = scalar_select %p180, %s181, %s182
      %p186 = pneg %p180
      %p187 = scmp.eq.s32.totalorder %s15, 1
      %p188 = por %p186, %p187
      %p189 = scmp.ne.s32.totalorder %s181, %s184
      %p190 = scmp.eq.s32.totalorder %s15, 0
      %p191 = por %p189, %p190
      %p192 = scmp.ne.s32.totalorder %s181, %s184
      %p193 = scmp.eq.s32.totalorder %s20, 1
      %p194 = por %p192, %p193
      %p195 = scmp.ne.s32.totalorder %s184, %s185
      %p196 = scmp.eq.s32.totalorder %s20, 0
      %p197 = por %p195, %p196
      %p198 = scmp.ne.s32.totalorder %s184, %s185
      %p199 = scmp.eq.s32.totalorder %s21, 1
      %p200 = por %p198, %p199
      %p202 = scmp.ne.s32.totalorder %s185, %s201
      %p203 = scmp.eq.s32.totalorder %s21, 0
      %p204 = por %p202, %p203
      %p205 = scmp.le.s32.totalorder 1, %s15
      %p206 = scmp.lt.s32.totalorder %s15, 3
      %p207 = pnand %p205, %p206
      %p208 = pneg %p207
      // Predicated region
      $region9: #{tpu_custom_call.1} parent=5 // pred_check
        _
      $region10: #{tpu_custom_call.1} parent=5 // pred_check_branch
        %210 = sbr.rel (%p207) target = $region12
      $region11: #{tpu_custom_call.1} parent=5 // pred_region
        %s211 = ssub.s32 %s15, 1
        // Predicated region
        $region13: #{tpu_custom_call.1} parent=11 // pred_check
          %p212 = pneg %p55
        $region14: #{tpu_custom_call.1} parent=11 // pred_check_branch
          %214 = sbr.rel (%p212) target = $region16
        $region15: #{tpu_custom_call.1} parent=11 // pred_region
          %s216 = ssub.s32 16, 16
          %217 = vsyncadd [#allocation3], %s216
          %s219 = sshll.u32 %s0, 4
          %s220 = int_to_ptr.vmem [resolvable:$true] %s219
          %222 = dma.vmem_to_smem %s220, 16, [#allocation2], [#allocation3]
        $region16: #{tpu_custom_call.1} parent=11 // pred_fallthru
          _
        // Predicated region
        $region17: #{tpu_custom_call.1} parent=11 // pred_check
          %p223 = pneg %p76
        $region18: #{tpu_custom_call.1} parent=11 // pred_check_branch
          %225 = sbr.rel (%p223) target = $region20
        $region19: #{tpu_custom_call.1} parent=11 // pred_region
          %s227 = ssub.s32 16, 16
          %228 = vsyncadd [#allocation5], %s227
          %s230 = sshll.u32 %s1, 4
          %s231 = int_to_ptr.vmem [resolvable:$true] %s230
          %233 = dma.vmem_to_smem %s231, 16, [#allocation4], [#allocation5]
        $region20: #{tpu_custom_call.1} parent=11 // pred_fallthru
          _
        // Predicated region
        $region21: #{tpu_custom_call.1} parent=11 // pred_check
          %p234 = pneg %p97
        $region22: #{tpu_custom_call.1} parent=11 // pred_check_branch
          %236 = sbr.rel (%p234) target = $region24
        $region23: #{tpu_custom_call.1} parent=11 // pred_region
          %s238 = ssub.s32 16, 16
          %239 = vsyncadd [#allocation5], %s238
          %s241 = sshll.u32 %s2, 4
          %s242 = int_to_ptr.vmem [resolvable:$true] %s241
          %244 = dma.vmem_to_smem %s242, 16, [#allocation6], [#allocation5]
        $region24: #{tpu_custom_call.1} parent=11 // pred_fallthru
          _
        // Predicated region
        $region25: #{tpu_custom_call.1} parent=11 // pred_check
          %p245 = pneg %p118
        $region26: #{tpu_custom_call.1} parent=11 // pred_check_branch
          %247 = sbr.rel (%p245) target = $region28
        $region27: #{tpu_custom_call.1} parent=11 // pred_region
          %s249 = ssub.s32 16, 16
          %250 = vsyncadd [#allocation8], %s249
          %s252 = sshll.u32 %s3, 4
          %s253 = int_to_ptr.vmem [resolvable:$true] %s252
          %255 = dma.vmem_to_smem %s253, 16, [#allocation7], [#allocation8]
        $region28: #{tpu_custom_call.1} parent=11 // pred_fallthru
          _
        // Predicated region
        $region29: #{tpu_custom_call.1} parent=11 // pred_check
          %p256 = pneg %p167
        $region30: #{tpu_custom_call.1} parent=11 // pred_check_branch
          %258 = sbr.rel (%p256) target = $region32
        $region31: #{tpu_custom_call.1} parent=11 // pred_region
          _
        $region32: #{tpu_custom_call.1} parent=11 // pred_fallthru
          _
      $region12: #{tpu_custom_call.1} parent=5 // pred_fallthru
        _
      %p259 = scmp.lt.s32.totalorder %s15, 2
      // Predicated region
      $region33: #{tpu_custom_call.1} parent=5 // pred_check
        %p260 = pneg %p259
      $region34: #{tpu_custom_call.1} parent=5 // pred_check_branch
        %262 = sbr.rel (%p260) target = $region36
      $region35: #{tpu_custom_call.1} parent=5 // pred_region
        // Predicated region
        $region37: #{tpu_custom_call.1} parent=35 // pred_check
          %p263 = pneg %p140
        $region38: #{tpu_custom_call.1} parent=35 // pred_check_branch
          %265 = sbr.rel (%p263) target = $region40
        $region39: #{tpu_custom_call.1} parent=35 // pred_region
          %p266 = scmp.lt.s32.totalorder %s22, 1
          %s267 = scalar_select %p266, %s22, 1
          %p268 = scmp.lt.s32.totalorder %s23, 0
          %s269 = scalar_select %p268, %s23, 0
          %s270 = smul.addr %s267, 8
          %s271 = sadd.s32 %s269, %s270
          %s272 = smul.addr %s271, 4
          %s273 = scalar_lea.vmem %s4, %s272
        $region40: #{tpu_custom_call.1} parent=35 // pred_fallthru
          _
      $region36: #{tpu_custom_call.1} parent=5 // pred_fallthru
        _
      %p274 = scmp.le.s32.totalorder 1, %s15
      %p275 = scmp.lt.s32.totalorder %s15, 3
      %p276 = pnand %p274, %p275
      %p277 = pneg %p276
      // Predicated region
      $region41: #{tpu_custom_call.1} parent=5 // pred_check
        _
      $region42: #{tpu_custom_call.1} parent=5 // pred_check_branch
        %279 = sbr.rel (%p276) target = $region44
      $region43: #{tpu_custom_call.1} parent=5 // pred_region
        %s280 = ssub.s32 %s15, 1
        // Predicated region
        $region45: #{tpu_custom_call.1} parent=43 // pred_check
          %p281 = pneg %p55
        $region46: #{tpu_custom_call.1} parent=43 // pred_check_branch
          %283 = sbr.rel (%p281) target = $region48
        $region47: #{tpu_custom_call.1} parent=43 // pred_region
          %284 = dma.done [#allocation3], 16
        $region48: #{tpu_custom_call.1} parent=43 // pred_fallthru
          _
        // Predicated region
        $region49: #{tpu_custom_call.1} parent=43 // pred_check
          %p285 = pneg %p76
        $region50: #{tpu_custom_call.1} parent=43 // pred_check_branch
          %287 = sbr.rel (%p285) target = $region52
        $region51: #{tpu_custom_call.1} parent=43 // pred_region
          %288 = dma.done [#allocation5], 16
        $region52: #{tpu_custom_call.1} parent=43 // pred_fallthru
          _
        // Predicated region
        $region53: #{tpu_custom_call.1} parent=43 // pred_check
          %p289 = pneg %p97
        $region54: #{tpu_custom_call.1} parent=43 // pred_check_branch
          %291 = sbr.rel (%p289) target = $region56
        $region55: #{tpu_custom_call.1} parent=43 // pred_region
          %292 = dma.done [#allocation5], 16
        $region56: #{tpu_custom_call.1} parent=43 // pred_fallthru
          _
        // Predicated region
        $region57: #{tpu_custom_call.1} parent=43 // pred_check
          %p293 = pneg %p118
        $region58: #{tpu_custom_call.1} parent=43 // pred_check_branch
          %295 = sbr.rel (%p293) target = $region60
        $region59: #{tpu_custom_call.1} parent=43 // pred_region
          %296 = dma.done [#allocation8], 16
        $region60: #{tpu_custom_call.1} parent=43 // pred_fallthru
          _
        %297 = sfence
        %p298 = pneg %p55
        %p299 = pneg %p52
        %p300 = pneg %p76
        %p301 = pneg %p73
        %p302 = pneg %p97
        %p303 = pneg %p94
        %p304 = pneg %p118
        %p305 = pneg %p115
        %p306 = scmp.lt.s32.totalorder %s25, 1
        %s307 = scalar_select %p306, %s25, 1
        %p308 = scmp.lt.s32.totalorder %s26, 0
        %s309 = scalar_select %p308, %s26, 0
        %s310 = smul.addr %s307, 8
        %s311 = sadd.s32 %s309, %s310
        %s312 = smul.addr %s311, 4
        %s313 = scalar_lea.vmem %s4, %s312
        %p314 = pneg %p146
        %p315 = pneg %p143
        %p316 = pneg %p167
        %p317 = pneg %p164
        %p318 = pneg %p197
        %p319 = pneg %p194
        %s320 = smul.u32 16, %s27
        %p321 = scmp.lt.s32.totalorder %s25, 1
        %s322 = scalar_select %p321, %s25, 1
        %p323 = scmp.lt.s32.totalorder %s320, 15
        %s324 = scalar_select %p323, %s320, 15
        %p325 = scmp.lt.s32.totalorder %s26, 0
        %s326 = scalar_select %p325, %s26, 0
        %s327 = smul.addr %s324, 2
        %s328 = sadd.s32 %s326, %s327
        %s329 = smul.addr %s322, 32
        %s330 = sadd.s32 %s328, %s329
        %s331 = smul.addr %s330, 4
        %s332 = scalar_lea.vmem %s6, %s331
        %p333 = scmp.lt.s32.totalorder %s25, 1
        %s334 = scalar_select %p333, %s25, 1
        %p335 = scmp.lt.s32.totalorder %s26, 0
        %s336 = scalar_select %p335, %s26, 0
        %s337 = smul.addr %s334, 8
        %s338 = sadd.s32 %s336, %s337
        %s339 = smul.addr %s338, 4
        %s340 = scalar_lea.vmem %s4, %s339
        %s341 = smul.u32 16, %s27
        %p342 = scmp.lt.s32.totalorder %s25, 1
        %s343 = scalar_select %p342, %s25, 1
        %p344 = scmp.lt.s32.totalorder %s341, 15
        %s345 = scalar_select %p344, %s341, 15
        %p346 = scmp.lt.s32.totalorder %s26, 0
        %s347 = scalar_select %p346, %s26, 0
        %s348 = smul.addr %s345, 2
        %s349 = sadd.s32 %s347, %s348
        %s350 = smul.addr %s343, 32
        %s351 = sadd.s32 %s349, %s350
        %s352 = smul.addr %s351, 4
        %s353 = scalar_lea.vmem %s6, %s352
        %s354 = smul.u32 16, %s27
        %s356 = smul.u32 %s27, 16
        %v357 = vld [vmem:[%s5] sm:$0xf]
        %v358 = vld [vmem:[%s5 + $0x4] sm:$0xf]
        %s359 = sld [smem:[#allocation6 + %s356]]
        %s360 = sld [smem:[#allocation2 + %s356]]
        %s361 = smul.addr %s360, 4
        %s362 = scalar_lea.vmem %s340, %s361
        %v363 = vld [vmem:[%s362] sm:$0xf]
        %v364 = vunpack.c.l.bf16 %v363
        %v365 = vstv %s359
        %v366 = vmul.f32 %v365, %v364
        %s367 = sld [smem:[#allocation7 + %s356]]
        %s368 = sld [smem:[#allocation4 + %s356]]
        %s369 = smul.addr %s368, 4
        %s370 = scalar_lea.vmem %s340, %s369
        %v371 = vld [vmem:[%s370] sm:$0xf]
        %v372 = vunpack.c.l.bf16 %v371
        %v373 = vstv %s367
        %v374 = vmul.f32 %v373, %v372
        %v375 = vadd.f32 %v366, %v374
        %v376 = vpack.c.bf16 %v375, %v375
        %v379 = vunpack.c.l.b16 %v357
        %v380 = vunpack.c.l.b16 %v358
        %v381 = vpack.c.b16 %v380, %v379
        %vm382 = vcmask 64512
        %v384 = vsel %vm382, %v381, 0
        %vm386 = vcmask 1043456
        %v388 = vsel %vm386, %v376, 0
        %390 = vmatprep.subr.bf16.mxu0 0
        %391 = vmatpush1.bf16.msra.mxu0 0
        %392 = vmatprep.subr.bf16.mxu0 0
        %393 = vmatpush1.bf16.msra.mxu0 0
        %394 = vmatprep.subr.bf16.mxu0 0
        %395 = vmatpush1.bf16.msra.mxu0 0
        %396 = vmatprep.subr.bf16.mxu0 0
        %397 = vmatpush1.bf16.msra.mxu0 0
        %398 = vmatprep.subr.bf16.mxu0 0
        %399 = vmatpush1.bf16.msra.mxu0 0
        %400 = vmatprep.subr.bf16.mxu0 0
        %401 = vmatpush1.bf16.msra.mxu0 0
        %402 = vmatprep.subr.bf16.mxu0 0
        %403 = vmatpush1.bf16.msra.mxu0 0
        %404 = vmatprep.subr.bf16.mxu0 0
        %405 = vmatpush1.bf16.msra.mxu0 %v388
        %406 = vmatprep.subr.bf16.mxu0 0
        %407 = vmatpush2.bf16.msra.mxu0 0
        %408 = vmatprep.subr.bf16.mxu0 0
        %409 = vmatpush2.bf16.msra.mxu0 0
        %410 = vmatprep.subr.bf16.mxu0 0
        %411 = vmatpush2.bf16.msra.mxu0 0
        %412 = vmatprep.subr.bf16.mxu0 0
        %413 = vmatpush2.bf16.msra.mxu0 0
        %414 = vmatprep.subr.bf16.mxu0 0
        %415 = vmatpush2.bf16.msra.mxu0 0
        %416 = vmatprep.subr.bf16.mxu0 0
        %417 = vmatpush2.bf16.msra.mxu0 0
        %418 = vmatprep.subr.bf16.mxu0 0
        %419 = vmatpush2.bf16.msra.mxu0 0
        %420 = vmatprep.subr.bf16.mxu0 0
        %421 = vmatpush2.bf16.msra.mxu0 0
        %422 = vmatprep.mubr.bf16.mxu0 0
        %423 = vmatmul.mubr.bf16.gmra.mxu0 %v384
        %v424 = vpop.f32.mrf.mxu0
        %v425 = vadd.f32 0.0, %v424
        %v426 = vpop.f32.mrf.mxu0
        %v427 = vpop.f32.mrf.mxu0
        %v428 = vadd.f32 0.0, %v427
        %v429 = vpop.f32.mrf.mxu0
        %430 = vdwg.mxu0
        %v431 = vpack.c.bf16 %v428, %v425
        %v433 = vunpack.c.l.b16 %v431
        %v434 = vunpack.c.h.b16 %v431
        %v435 = vpack.c.b16 %v433, %v433
        %v436 = vpack.c.b16 %v434, %v434
        %vm439 = vcmask 27648
        %440 = vst.msk [vmem:[%s353] sm:$0xf] %vm439, %v435
        %441 = vst.msk [vmem:[%s353 + $0x4] sm:$0xf] %vm439, %v436
        %s442 = sadd.s32 %s356, 1
        %s443 = sld [smem:[#allocation6 + %s442]]
        %s444 = sld [smem:[#allocation2 + %s442]]
        %s445 = smul.addr %s444, 4
        %s446 = scalar_lea.vmem %s340, %s445
        %v447 = vld [vmem:[%s446] sm:$0xf]
        %v448 = vunpack.c.l.bf16 %v447
        %v449 = vstv %s443
        %v450 = vmul.f32 %v449, %v448
        %s451 = sld [smem:[#allocation7 + %s442]]
        %s452 = sld [smem:[#allocation4 + %s442]]
        %s453 = smul.addr %s452, 4
        %s454 = scalar_lea.vmem %s340, %s453
        %v455 = vld [vmem:[%s454] sm:$0xf]
        %v456 = vunpack.c.l.bf16 %v455
        %v457 = vstv %s451
        %v458 = vmul.f32 %v457, %v456
        %v459 = vadd.f32 %v450, %v458
        %v460 = vpack.c.bf16 %v459, %v459
        %v462 = vsel %vm386, %v460, 0
        %464 = vmatprep.subr.bf16.mxu0 0
        %465 = vmatpush1.bf16.msra.mxu0 0
        %466 = vmatprep.subr.bf16.mxu0 0
        %467 = vmatpush1.bf16.msra.mxu0 0
        %468 = vmatprep.subr.bf16.mxu0 0
        %469 = vmatpush1.bf16.msra.mxu0 0
        %470 = vmatprep.subr.bf16.mxu0 0
        %471 = vmatpush1.bf16.msra.mxu0 0
        %472 = vmatprep.subr.bf16.mxu0 0
        %473 = vmatpush1.bf16.msra.mxu0 0
        %474 = vmatprep.subr.bf16.mxu0 0
        %475 = vmatpush1.bf16.msra.mxu0 0
        %476 = vmatprep.subr.bf16.mxu0 0
        %477 = vmatpush1.bf16.msra.mxu0 0
        %478 = vmatprep.subr.bf16.mxu0 0
        %479 = vmatpush1.bf16.msra.mxu0 %v462
        %480 = vmatprep.subr.bf16.mxu0 0
        %481 = vmatpush2.bf16.msra.mxu0 0
        %482 = vmatprep.subr.bf16.mxu0 0
        %483 = vmatpush2.bf16.msra.mxu0 0
        %484 = vmatprep.subr.bf16.mxu0 0
        %485 = vmatpush2.bf16.msra.mxu0 0
        %486 = vmatprep.subr.bf16.mxu0 0
        %487 = vmatpush2.bf16.msra.mxu0 0
        %488 = vmatprep.subr.bf16.mxu0 0
        %489 = vmatpush2.bf16.msra.mxu0 0
        %490 = vmatprep.subr.bf16.mxu0 0
        %491 = vmatpush2.bf16.msra.mxu0 0
        %492 = vmatprep.subr.bf16.mxu0 0
        %493 = vmatpush2.bf16.msra.mxu0 0
        %494 = vmatprep.subr.bf16.mxu0 0
        %495 = vmatpush2.bf16.msra.mxu0 0
        %496 = vmatprep.mubr.bf16.mxu0 0
        %497 = vmatmul.mubr.bf16.gmra.mxu0 %v384
        %v498 = vpop.f32.mrf.mxu0
        %v499 = vadd.f32 0.0, %v498
        %v500 = vpop.f32.mrf.mxu0
        %v501 = vpop.f32.mrf.mxu0
        %v502 = vadd.f32 0.0, %v501
        %v503 = vpop.f32.mrf.mxu0
        %504 = vdwg.mxu0
        %v505 = vpack.c.bf16 %v502, %v499
        %v507 = vunpack.c.l.b16 %v505
        %v508 = vunpack.c.h.b16 %v505
        %v509 = vpack.c.b16 %v507, %v507
        %v510 = vpack.c.b16 %v508, %v508
        %s513 = scalar_lea.vmem %s353, 8
        %514 = vst.msk [vmem:[%s513] sm:$0xf] %vm439, %v509
        %515 = vst.msk [vmem:[%s513 + $0x4] sm:$0xf] %vm439, %v510
        %s516 = sadd.s32 %s356, 2
        %s517 = sld [smem:[#allocation6 + %s516]]
        %s518 = sld [smem:[#allocation2 + %s516]]
        %s519 = smul.addr %s518, 4
        %s520 = scalar_lea.vmem %s340, %s519
        %v521 = vld [vmem:[%s520] sm:$0xf]
        %v522 = vunpack.c.l.bf16 %v521
        %v523 = vstv %s517
        %v524 = vmul.f32 %v523, %v522
        %s525 = sld [smem:[#allocation7 + %s516]]
        %s526 = sld [smem:[#allocation4 + %s516]]
        %s527 = smul.addr %s526, 4
        %s528 = scalar_lea.vmem %s340, %s527
        %v529 = vld [vmem:[%s528] sm:$0xf]
        %v530 = vunpack.c.l.bf16 %v529
        %v531 = vstv %s525
        %v532 = vmul.f32 %v531, %v530
        %v533 = vadd.f32 %v524, %v532
        %v534 = vpack.c.bf16 %v533, %v533
        %v536 = vsel %vm386, %v534, 0
        %538 = vmatprep.subr.bf16.mxu0 0
        %539 = vmatpush1.bf16.msra.mxu0 0
        %540 = vmatprep.subr.bf16.mxu0 0
        %541 = vmatpush1.bf16.msra.mxu0 0
        %542 = vmatprep.subr.bf16.mxu0 0
        %543 = vmatpush1.bf16.msra.mxu0 0
        %544 = vmatprep.subr.bf16.mxu0 0
        %545 = vmatpush1.bf16.msra.mxu0 0
        %546 = vmatprep.subr.bf16.mxu0 0
        %547 = vmatpush1.bf16.msra.mxu0 0
        %548 = vmatprep.subr.bf16.mxu0 0
        %549 = vmatpush1.bf16.msra.mxu0 0
        %550 = vmatprep.subr.bf16.mxu0 0
        %551 = vmatpush1.bf16.msra.mxu0 0
        %552 = vmatprep.subr.bf16.mxu0 0
        %553 = vmatpush1.bf16.msra.mxu0 %v536
        %554 = vmatprep.subr.bf16.mxu0 0
        %555 = vmatpush2.bf16.msra.mxu0 0
        %556 = vmatprep.subr.bf16.mxu0 0
        %557 = vmatpush2.bf16.msra.mxu0 0
        %558 = vmatprep.subr.bf16.mxu0 0
        %559 = vmatpush2.bf16.msra.mxu0 0
        %560 = vmatprep.subr.bf16.mxu0 0
        %561 = vmatpush2.bf16.msra.mxu0 0
        %562 = vmatprep.subr.bf16.mxu0 0
        %563 = vmatpush2.bf16.msra.mxu0 0
        %564 = vmatprep.subr.bf16.mxu0 0
        %565 = vmatpush2.bf16.msra.mxu0 0
        %566 = vmatprep.subr.bf16.mxu0 0
        %567 = vmatpush2.bf16.msra.mxu0 0
        %568 = vmatprep.subr.bf16.mxu0 0
        %569 = vmatpush2.bf16.msra.mxu0 0
        %570 = vmatprep.mubr.bf16.mxu0 0
        %571 = vmatmul.mubr.bf16.gmra.mxu0 %v384
        %v572 = vpop.f32.mrf.mxu0
        %v573 = vadd.f32 0.0, %v572
        %v574 = vpop.f32.mrf.mxu0
        %v575 = vpop.f32.mrf.mxu0
        %v576 = vadd.f32 0.0, %v575
        %v577 = vpop.f32.mrf.mxu0
        %578 = vdwg.mxu0
        %v579 = vpack.c.bf16 %v576, %v573
        %v581 = vunpack.c.l.b16 %v579
        %v582 = vunpack.c.h.b16 %v579
        %v583 = vpack.c.b16 %v581, %v581
        %v584 = vpack.c.b16 %v582, %v582
        %s587 = scalar_lea.vmem %s353, 16
        %588 = vst.msk [vmem:[%s587] sm:$0xf] %vm439, %v583
        %589 = vst.msk [vmem:[%s587 + $0x4] sm:$0xf] %vm439, %v584
        %s590 = sadd.s32 %s356, 3
        %s591 = sld [smem:[#allocation6 + %s590]]
        %s592 = sld [smem:[#allocation2 + %s590]]
        %s593 = smul.addr %s592, 4
        %s594 = scalar_lea.vmem %s340, %s593
        %v595 = vld [vmem:[%s594] sm:$0xf]
        %v596 = vunpack.c.l.bf16 %v595
        %v597 = vstv %s591
        %v598 = vmul.f32 %v597, %v596
        %s599 = sld [smem:[#allocation7 + %s590]]
        %s600 = sld [smem:[#allocation4 + %s590]]
        %s601 = smul.addr %s600, 4
        %s602 = scalar_lea.vmem %s340, %s601
        %v603 = vld [vmem:[%s602] sm:$0xf]
        %v604 = vunpack.c.l.bf16 %v603
        %v605 = vstv %s599
        %v606 = vmul.f32 %v605, %v604
        %v607 = vadd.f32 %v598, %v606
        %v608 = vpack.c.bf16 %v607, %v607
        %v610 = vsel %vm386, %v608, 0
        %612 = vmatprep.subr.bf16.mxu0 0
        %613 = vmatpush1.bf16.msra.mxu0 0
        %614 = vmatprep.subr.bf16.mxu0 0
        %615 = vmatpush1.bf16.msra.mxu0 0
        %616 = vmatprep.subr.bf16.mxu0 0
        %617 = vmatpush1.bf16.msra.mxu0 0
        %618 = vmatprep.subr.bf16.mxu0 0
        %619 = vmatpush1.bf16.msra.mxu0 0
        %620 = vmatprep.subr.bf16.mxu0 0
        %621 = vmatpush1.bf16.msra.mxu0 0
        %622 = vmatprep.subr.bf16.mxu0 0
        %623 = vmatpush1.bf16.msra.mxu0 0
        %624 = vmatprep.subr.bf16.mxu0 0
        %625 = vmatpush1.bf16.msra.mxu0 0
        %626 = vmatprep.subr.bf16.mxu0 0
        %627 = vmatpush1.bf16.msra.mxu0 %v610
        %628 = vmatprep.subr.bf16.mxu0 0
        %629 = vmatpush2.bf16.msra.mxu0 0
        %630 = vmatprep.subr.bf16.mxu0 0
        %631 = vmatpush2.bf16.msra.mxu0 0
        %632 = vmatprep.subr.bf16.mxu0 0
        %633 = vmatpush2.bf16.msra.mxu0 0
        %634 = vmatprep.subr.bf16.mxu0 0
        %635 = vmatpush2.bf16.msra.mxu0 0
        %636 = vmatprep.subr.bf16.mxu0 0
        %637 = vmatpush2.bf16.msra.mxu0 0
        %638 = vmatprep.subr.bf16.mxu0 0
        %639 = vmatpush2.bf16.msra.mxu0 0
        %640 = vmatprep.subr.bf16.mxu0 0
        %641 = vmatpush2.bf16.msra.mxu0 0
        %642 = vmatprep.subr.bf16.mxu0 0
        %643 = vmatpush2.bf16.msra.mxu0 0
        %644 = vmatprep.mubr.bf16.mxu0 0
        %645 = vmatmul.mubr.bf16.gmra.mxu0 %v384
        %v646 = vpop.f32.mrf.mxu0
        %v647 = vadd.f32 0.0, %v646
        %v648 = vpop.f32.mrf.mxu0
        %v649 = vpop.f32.mrf.mxu0
        %v650 = vadd.f32 0.0, %v649
        %v651 = vpop.f32.mrf.mxu0
        %652 = vdwg.mxu0
        %v653 = vpack.c.bf16 %v650, %v647
        %v655 = vunpack.c.l.b16 %v653
        %v656 = vunpack.c.h.b16 %v653
        %v657 = vpack.c.b16 %v655, %v655
        %v658 = vpack.c.b16 %v656, %v656
        %s661 = scalar_lea.vmem %s353, 24
        %662 = vst.msk [vmem:[%s661] sm:$0xf] %vm439, %v657
        %663 = vst.msk [vmem:[%s661 + $0x4] sm:$0xf] %vm439, %v658
        %s664 = sadd.s32 %s356, 4
        %s665 = sld [smem:[#allocation6 + %s664]]
        %s666 = sld [smem:[#allocation2 + %s664]]
        %s667 = smul.addr %s666, 4
        %s668 = scalar_lea.vmem %s340, %s667
        %v669 = vld [vmem:[%s668] sm:$0xf]
        %v670 = vunpack.c.l.bf16 %v669
        %v671 = vstv %s665
        %v672 = vmul.f32 %v671, %v670
        %s673 = sld [smem:[#allocation7 + %s664]]
        %s674 = sld [smem:[#allocation4 + %s664]]
        %s675 = smul.addr %s674, 4
        %s676 = scalar_lea.vmem %s340, %s675
        %v677 = vld [vmem:[%s676] sm:$0xf]
        %v678 = vunpack.c.l.bf16 %v677
        %v679 = vstv %s673
        %v680 = vmul.f32 %v679, %v678
        %v681 = vadd.f32 %v672, %v680
        %v682 = vpack.c.bf16 %v681, %v681
        %v684 = vsel %vm386, %v682, 0
        %686 = vmatprep.subr.bf16.mxu0 0
        %687 = vmatpush1.bf16.msra.mxu0 0
        %688 = vmatprep.subr.bf16.mxu0 0
        %689 = vmatpush1.bf16.msra.mxu0 0
        %690 = vmatprep.subr.bf16.mxu0 0
        %691 = vmatpush1.bf16.msra.mxu0 0
        %692 = vmatprep.subr.bf16.mxu0 0
        %693 = vmatpush1.bf16.msra.mxu0 0
        %694 = vmatprep.subr.bf16.mxu0 0
        %695 = vmatpush1.bf16.msra.mxu0 0
        %696 = vmatprep.subr.bf16.mxu0 0
        %697 = vmatpush1.bf16.msra.mxu0 0
        %698 = vmatprep.subr.bf16.mxu0 0
        %699 = vmatpush1.bf16.msra.mxu0 0
        %700 = vmatprep.subr.bf16.mxu0 0
        %701 = vmatpush1.bf16.msra.mxu0 %v684
        %702 = vmatprep.subr.bf16.mxu0 0
        %703 = vmatpush2.bf16.msra.mxu0 0
        %704 = vmatprep.subr.bf16.mxu0 0
        %705 = vmatpush2.bf16.msra.mxu0 0
        %706 = vmatprep.subr.bf16.mxu0 0
        %707 = vmatpush2.bf16.msra.mxu0 0
        %708 = vmatprep.subr.bf16.mxu0 0
        %709 = vmatpush2.bf16.msra.mxu0 0
        %710 = vmatprep.subr.bf16.mxu0 0
        %711 = vmatpush2.bf16.msra.mxu0 0
        %712 = vmatprep.subr.bf16.mxu0 0
        %713 = vmatpush2.bf16.msra.mxu0 0
        %714 = vmatprep.subr.bf16.mxu0 0
        %715 = vmatpush2.bf16.msra.mxu0 0
        %716 = vmatprep.subr.bf16.mxu0 0
        %717 = vmatpush2.bf16.msra.mxu0 0
        %718 = vmatprep.mubr.bf16.mxu0 0
        %719 = vmatmul.mubr.bf16.gmra.mxu0 %v384
        %v720 = vpop.f32.mrf.mxu0
        %v721 = vadd.f32 0.0, %v720
        %v722 = vpop.f32.mrf.mxu0
        %v723 = vpop.f32.mrf.mxu0
        %v724 = vadd.f32 0.0, %v723
        %v725 = vpop.f32.mrf.mxu0
        %726 = vdwg.mxu0
        %v727 = vpack.c.bf16 %v724, %v721
        %v729 = vunpack.c.l.b16 %v727
        %v730 = vunpack.c.h.b16 %v727
        %v731 = vpack.c.b16 %v729, %v729
        %v732 = vpack.c.b16 %v730, %v730
        %s735 = scalar_lea.vmem %s353, 32
        %736 = vst.msk [vmem:[%s735] sm:$0xf] %vm439, %v731
        %737 = vst.msk [vmem:[%s735 + $0x4] sm:$0xf] %vm439, %v732
        %s738 = sadd.s32 %s356, 5
        %s739 = sld [smem:[#allocation6 + %s738]]
        %s740 = sld [smem:[#allocation2 + %s738]]
        %s741 = smul.addr %s740, 4
        %s742 = scalar_lea.vmem %s340, %s741
        %v743 = vld [vmem:[%s742] sm:$0xf]
        %v744 = vunpack.c.l.bf16 %v743
        %v745 = vstv %s739
        %v746 = vmul.f32 %v745, %v744
        %s747 = sld [smem:[#allocation7 + %s738]]
        %s748 = sld [smem:[#allocation4 + %s738]]
        %s749 = smul.addr %s748, 4
        %s750 = scalar_lea.vmem %s340, %s749
        %v751 = vld [vmem:[%s750] sm:$0xf]
        %v752 = vunpack.c.l.bf16 %v751
        %v753 = vstv %s747
        %v754 = vmul.f32 %v753, %v752
        %v755 = vadd.f32 %v746, %v754
        %v756 = vpack.c.bf16 %v755, %v755
        %v758 = vsel %vm386, %v756, 0
        %760 = vmatprep.subr.bf16.mxu0 0
        %761 = vmatpush1.bf16.msra.mxu0 0
        %762 = vmatprep.subr.bf16.mxu0 0
        %763 = vmatpush1.bf16.msra.mxu0 0
        %764 = vmatprep.subr.bf16.mxu0 0
        %765 = vmatpush1.bf16.msra.mxu0 0
        %766 = vmatprep.subr.bf16.mxu0 0
        %767 = vmatpush1.bf16.msra.mxu0 0
        %768 = vmatprep.subr.bf16.mxu0 0
        %769 = vmatpush1.bf16.msra.mxu0 0
        %770 = vmatprep.subr.bf16.mxu0 0
        %771 = vmatpush1.bf16.msra.mxu0 0
        %772 = vmatprep.subr.bf16.mxu0 0
        %773 = vmatpush1.bf16.msra.mxu0 0
        %774 = vmatprep.subr.bf16.mxu0 0
        %775 = vmatpush1.bf16.msra.mxu0 %v758
        %776 = vmatprep.subr.bf16.mxu0 0
        %777 = vmatpush2.bf16.msra.mxu0 0
        %778 = vmatprep.subr.bf16.mxu0 0
        %779 = vmatpush2.bf16.msra.mxu0 0
        %780 = vmatprep.subr.bf16.mxu0 0
        %781 = vmatpush2.bf16.msra.mxu0 0
        %782 = vmatprep.subr.bf16.mxu0 0
        %783 = vmatpush2.bf16.msra.mxu0 0
        %784 = vmatprep.subr.bf16.mxu0 0
        %785 = vmatpush2.bf16.msra.mxu0 0
        %786 = vmatprep.subr.bf16.mxu0 0
        %787 = vmatpush2.bf16.msra.mxu0 0
        %788 = vmatprep.subr.bf16.mxu0 0
        %789 = vmatpush2.bf16.msra.mxu0 0
        %790 = vmatprep.subr.bf16.mxu0 0
        %791 = vmatpush2.bf16.msra.mxu0 0
        %792 = vmatprep.mubr.bf16.mxu0 0
        %793 = vmatmul.mubr.bf16.gmra.mxu0 %v384
        %v794 = vpop.f32.mrf.mxu0
        %v795 = vadd.f32 0.0, %v794
        %v796 = vpop.f32.mrf.mxu0
        %v797 = vpop.f32.mrf.mxu0
        %v798 = vadd.f32 0.0, %v797
        %v799 = vpop.f32.mrf.mxu0
        %800 = vdwg.mxu0
        %v801 = vpack.c.bf16 %v798, %v795
        %v803 = vunpack.c.l.b16 %v801
        %v804 = vunpack.c.h.b16 %v801
        %v805 = vpack.c.b16 %v803, %v803
        %v806 = vpack.c.b16 %v804, %v804
        %s809 = scalar_lea.vmem %s353, 40
        %810 = vst.msk [vmem:[%s809] sm:$0xf] %vm439, %v805
        %811 = vst.msk [vmem:[%s809 + $0x4] sm:$0xf] %vm439, %v806
        %s812 = sadd.s32 %s356, 6
        %s813 = sld [smem:[#allocation6 + %s812]]
        %s814 = sld [smem:[#allocation2 + %s812]]
        %s815 = smul.addr %s814, 4
        %s816 = scalar_lea.vmem %s340, %s815
        %v817 = vld [vmem:[%s816] sm:$0xf]
        %v818 = vunpack.c.l.bf16 %v817
        %v819 = vstv %s813
        %v820 = vmul.f32 %v819, %v818
        %s821 = sld [smem:[#allocation7 + %s812]]
        %s822 = sld [smem:[#allocation4 + %s812]]
        %s823 = smul.addr %s822, 4
        %s824 = scalar_lea.vmem %s340, %s823
        %v825 = vld [vmem:[%s824] sm:$0xf]
        %v826 = vunpack.c.l.bf16 %v825
        %v827 = vstv %s821
        %v828 = vmul.f32 %v827, %v826
        %v829 = vadd.f32 %v820, %v828
        %v830 = vpack.c.bf16 %v829, %v829
        %v832 = vsel %vm386, %v830, 0
        %834 = vmatprep.subr.bf16.mxu0 0
        %835 = vmatpush1.bf16.msra.mxu0 0
        %836 = vmatprep.subr.bf16.mxu0 0
        %837 = vmatpush1.bf16.msra.mxu0 0
        %838 = vmatprep.subr.bf16.mxu0 0
        %839 = vmatpush1.bf16.msra.mxu0 0
        %840 = vmatprep.subr.bf16.mxu0 0
        %841 = vmatpush1.bf16.msra.mxu0 0
        %842 = vmatprep.subr.bf16.mxu0 0
        %843 = vmatpush1.bf16.msra.mxu0 0
        %844 = vmatprep.subr.bf16.mxu0 0
        %845 = vmatpush1.bf16.msra.mxu0 0
        %846 = vmatprep.subr.bf16.mxu0 0
        %847 = vmatpush1.bf16.msra.mxu0 0
        %848 = vmatprep.subr.bf16.mxu0 0
        %849 = vmatpush1.bf16.msra.mxu0 %v832
        %850 = vmatprep.subr.bf16.mxu0 0
        %851 = vmatpush2.bf16.msra.mxu0 0
        %852 = vmatprep.subr.bf16.mxu0 0
        %853 = vmatpush2.bf16.msra.mxu0 0
        %854 = vmatprep.subr.bf16.mxu0 0
        %855 = vmatpush2.bf16.msra.mxu0 0
        %856 = vmatprep.subr.bf16.mxu0 0
        %857 = vmatpush2.bf16.msra.mxu0 0
        %858 = vmatprep.subr.bf16.mxu0 0
        %859 = vmatpush2.bf16.msra.mxu0 0
        %860 = vmatprep.subr.bf16.mxu0 0
        %861 = vmatpush2.bf16.msra.mxu0 0
        %862 = vmatprep.subr.bf16.mxu0 0
        %863 = vmatpush2.bf16.msra.mxu0 0
        %864 = vmatprep.subr.bf16.mxu0 0
        %865 = vmatpush2.bf16.msra.mxu0 0
        %866 = vmatprep.mubr.bf16.mxu0 0
        %867 = vmatmul.mubr.bf16.gmra.mxu0 %v384
        %v868 = vpop.f32.mrf.mxu0
        %v869 = vadd.f32 0.0, %v868
        %v870 = vpop.f32.mrf.mxu0
        %v871 = vpop.f32.mrf.mxu0
        %v872 = vadd.f32 0.0, %v871
        %v873 = vpop.f32.mrf.mxu0
        %874 = vdwg.mxu0
        %v875 = vpack.c.bf16 %v872, %v869
        %v877 = vunpack.c.l.b16 %v875
        %v878 = vunpack.c.h.b16 %v875
        %v879 = vpack.c.b16 %v877, %v877
        %v880 = vpack.c.b16 %v878, %v878
        %s883 = scalar_lea.vmem %s353, 48
        %884 = vst.msk [vmem:[%s883] sm:$0xf] %vm439, %v879
        %885 = vst.msk [vmem:[%s883 + $0x4] sm:$0xf] %vm439, %v880
        %s886 = sadd.s32 %s356, 7
        %s887 = sld [smem:[#allocation6 + %s886]]
        %s888 = sld [smem:[#allocation2 + %s886]]
        %s889 = smul.addr %s888, 4
        %s890 = scalar_lea.vmem %s340, %s889
        %v891 = vld [vmem:[%s890] sm:$0xf]
        %v892 = vunpack.c.l.bf16 %v891
        %v893 = vstv %s887
        %v894 = vmul.f32 %v893, %v892
        %s895 = sld [smem:[#allocation7 + %s886]]
        %s896 = sld [smem:[#allocation4 + %s886]]
        %s897 = smul.addr %s896, 4
        %s898 = scalar_lea.vmem %s340, %s897
        %v899 = vld [vmem:[%s898] sm:$0xf]
        %v900 = vunpack.c.l.bf16 %v899
        %v901 = vstv %s895
        %v902 = vmul.f32 %v901, %v900
        %v903 = vadd.f32 %v894, %v902
        %v904 = vpack.c.bf16 %v903, %v903
        %v906 = vsel %vm386, %v904, 0
        %908 = vmatprep.subr.bf16.mxu0 0
        %909 = vmatpush1.bf16.msra.mxu0 0
        %910 = vmatprep.subr.bf16.mxu0 0
        %911 = vmatpush1.bf16.msra.mxu0 0
        %912 = vmatprep.subr.bf16.mxu0 0
        %913 = vmatpush1.bf16.msra.mxu0 0
        %914 = vmatprep.subr.bf16.mxu0 0
        %915 = vmatpush1.bf16.msra.mxu0 0
        %916 = vmatprep.subr.bf16.mxu0 0
        %917 = vmatpush1.bf16.msra.mxu0 0
        %918 = vmatprep.subr.bf16.mxu0 0
        %919 = vmatpush1.bf16.msra.mxu0 0
        %920 = vmatprep.subr.bf16.mxu0 0
        %921 = vmatpush1.bf16.msra.mxu0 0
        %922 = vmatprep.subr.bf16.mxu0 0
        %923 = vmatpush1.bf16.msra.mxu0 %v906
        %924 = vmatprep.subr.bf16.mxu0 0
        %925 = vmatpush2.bf16.msra.mxu0 0
        %926 = vmatprep.subr.bf16.mxu0 0
        %927 = vmatpush2.bf16.msra.mxu0 0
        %928 = vmatprep.subr.bf16.mxu0 0
        %929 = vmatpush2.bf16.msra.mxu0 0
        %930 = vmatprep.subr.bf16.mxu0 0
        %931 = vmatpush2.bf16.msra.mxu0 0
        %932 = vmatprep.subr.bf16.mxu0 0
        %933 = vmatpush2.bf16.msra.mxu0 0
        %934 = vmatprep.subr.bf16.mxu0 0
        %935 = vmatpush2.bf16.msra.mxu0 0
        %936 = vmatprep.subr.bf16.mxu0 0
        %937 = vmatpush2.bf16.msra.mxu0 0
        %938 = vmatprep.subr.bf16.mxu0 0
        %939 = vmatpush2.bf16.msra.mxu0 0
        %940 = vmatprep.mubr.bf16.mxu0 0
        %941 = vmatmul.mubr.bf16.gmra.mxu0 %v384
        %v942 = vpop.f32.mrf.mxu0
        %v943 = vadd.f32 0.0, %v942
        %v944 = vpop.f32.mrf.mxu0
        %v945 = vpop.f32.mrf.mxu0
        %v946 = vadd.f32 0.0, %v945
        %v947 = vpop.f32.mrf.mxu0
        %948 = vdwg.mxu0
        %v949 = vpack.c.bf16 %v946, %v943
        %v951 = vunpack.c.l.b16 %v949
        %v952 = vunpack.c.h.b16 %v949
        %v953 = vpack.c.b16 %v951, %v951
        %v954 = vpack.c.b16 %v952, %v952
        %s957 = scalar_lea.vmem %s353, 56
        %958 = vst.msk [vmem:[%s957] sm:$0xf] %vm439, %v953
        %959 = vst.msk [vmem:[%s957 + $0x4] sm:$0xf] %vm439, %v954
        %s960 = sadd.s32 %s356, 8
        %s961 = sld [smem:[#allocation6 + %s960]]
        %s962 = sld [smem:[#allocation2 + %s960]]
        %s963 = smul.addr %s962, 4
        %s964 = scalar_lea.vmem %s340, %s963
        %v965 = vld [vmem:[%s964] sm:$0xf]
        %v966 = vunpack.c.l.bf16 %v965
        %v967 = vstv %s961
        %v968 = vmul.f32 %v967, %v966
        %s969 = sld [smem:[#allocation7 + %s960]]
        %s970 = sld [smem:[#allocation4 + %s960]]
        %s971 = smul.addr %s970, 4
        %s972 = scalar_lea.vmem %s340, %s971
        %v973 = vld [vmem:[%s972] sm:$0xf]
        %v974 = vunpack.c.l.bf16 %v973
        %v975 = vstv %s969
        %v976 = vmul.f32 %v975, %v974
        %v977 = vadd.f32 %v968, %v976
        %v978 = vpack.c.bf16 %v977, %v977
        %v980 = vsel %vm386, %v978, 0
        %982 = vmatprep.subr.bf16.mxu0 0
        %983 = vmatpush1.bf16.msra.mxu0 0
        %984 = vmatprep.subr.bf16.mxu0 0
        %985 = vmatpush1.bf16.msra.mxu0 0
        %986 = vmatprep.subr.bf16.mxu0 0
        %987 = vmatpush1.bf16.msra.mxu0 0
        %988 = vmatprep.subr.bf16.mxu0 0
        %989 = vmatpush1.bf16.msra.mxu0 0
        %990 = vmatprep.subr.bf16.mxu0 0
        %991 = vmatpush1.bf16.msra.mxu0 0
        %992 = vmatprep.subr.bf16.mxu0 0
        %993 = vmatpush1.bf16.msra.mxu0 0
        %994 = vmatprep.subr.bf16.mxu0 0
        %995 = vmatpush1.bf16.msra.mxu0 0
        %996 = vmatprep.subr.bf16.mxu0 0
        %997 = vmatpush1.bf16.msra.mxu0 %v980
        %998 = vmatprep.subr.bf16.mxu0 0
        %999 = vmatpush2.bf16.msra.mxu0 0
        %1000 = vmatprep.subr.bf16.mxu0 0
        %1001 = vmatpush2.bf16.msra.mxu0 0
        %1002 = vmatprep.subr.bf16.mxu0 0
        %1003 = vmatpush2.bf16.msra.mxu0 0
        %1004 = vmatprep.subr.bf16.mxu0 0
        %1005 = vmatpush2.bf16.msra.mxu0 0
        %1006 = vmatprep.subr.bf16.mxu0 0
        %1007 = vmatpush2.bf16.msra.mxu0 0
        %1008 = vmatprep.subr.bf16.mxu0 0
        %1009 = vmatpush2.bf16.msra.mxu0 0
        %1010 = vmatprep.subr.bf16.mxu0 0
        %1011 = vmatpush2.bf16.msra.mxu0 0
        %1012 = vmatprep.subr.bf16.mxu0 0
        %1013 = vmatpush2.bf16.msra.mxu0 0
        %1014 = vmatprep.mubr.bf16.mxu0 0
        %1015 = vmatmul.mubr.bf16.gmra.mxu0 %v384
        %v1016 = vpop.f32.mrf.mxu0
        %v1017 = vadd.f32 0.0, %v1016
        %v1018 = vpop.f32.mrf.mxu0
        %v1019 = vpop.f32.mrf.mxu0
        %v1020 = vadd.f32 0.0, %v1019
        %v1021 = vpop.f32.mrf.mxu0
        %1022 = vdwg.mxu0
        %v1023 = vpack.c.bf16 %v1020, %v1017
        %v1025 = vunpack.c.l.b16 %v1023
        %v1026 = vunpack.c.h.b16 %v1023
        %v1027 = vpack.c.b16 %v1025, %v1025
        %v1028 = vpack.c.b16 %v1026, %v1026
        %s1031 = scalar_lea.vmem %s353, 64
        %1032 = vst.msk [vmem:[%s1031] sm:$0xf] %vm439, %v1027
        %1033 = vst.msk [vmem:[%s1031 + $0x4] sm:$0xf] %vm439, %v1028
        %s1034 = sadd.s32 %s356, 9
        %s1035 = sld [smem:[#allocation6 + %s1034]]
        %s1036 = sld [smem:[#allocation2 + %s1034]]
        %s1037 = smul.addr %s1036, 4
        %s1038 = scalar_lea.vmem %s340, %s1037
        %v1039 = vld [vmem:[%s1038] sm:$0xf]
        %v1040 = vunpack.c.l.bf16 %v1039
        %v1041 = vstv %s1035
        %v1042 = vmul.f32 %v1041, %v1040
        %s1043 = sld [smem:[#allocation7 + %s1034]]
        %s1044 = sld [smem:[#allocation4 + %s1034]]
        %s1045 = smul.addr %s1044, 4
        %s1046 = scalar_lea.vmem %s340, %s1045
        %v1047 = vld [vmem:[%s1046] sm:$0xf]
        %v1048 = vunpack.c.l.bf16 %v1047
        %v1049 = vstv %s1043
        %v1050 = vmul.f32 %v1049, %v1048
        %v1051 = vadd.f32 %v1042, %v1050
        %v1052 = vpack.c.bf16 %v1051, %v1051
        %v1054 = vsel %vm386, %v1052, 0
        %1056 = vmatprep.subr.bf16.mxu0 0
        %1057 = vmatpush1.bf16.msra.mxu0 0
        %1058 = vmatprep.subr.bf16.mxu0 0
        %1059 = vmatpush1.bf16.msra.mxu0 0
        %1060 = vmatprep.subr.bf16.mxu0 0
        %1061 = vmatpush1.bf16.msra.mxu0 0
        %1062 = vmatprep.subr.bf16.mxu0 0
        %1063 = vmatpush1.bf16.msra.mxu0 0
        %1064 = vmatprep.subr.bf16.mxu0 0
        %1065 = vmatpush1.bf16.msra.mxu0 0
        %1066 = vmatprep.subr.bf16.mxu0 0
        %1067 = vmatpush1.bf16.msra.mxu0 0
        %1068 = vmatprep.subr.bf16.mxu0 0
        %1069 = vmatpush1.bf16.msra.mxu0 0
        %1070 = vmatprep.subr.bf16.mxu0 0
        %1071 = vmatpush1.bf16.msra.mxu0 %v1054
        %1072 = vmatprep.subr.bf16.mxu0 0
        %1073 = vmatpush2.bf16.msra.mxu0 0
        %1074 = vmatprep.subr.bf16.mxu0 0
        %1075 = vmatpush2.bf16.msra.mxu0 0
        %1076 = vmatprep.subr.bf16.mxu0 0
        %1077 = vmatpush2.bf16.msra.mxu0 0
        %1078 = vmatprep.subr.bf16.mxu0 0
        %1079 = vmatpush2.bf16.msra.mxu0 0
        %1080 = vmatprep.subr.bf16.mxu0 0
        %1081 = vmatpush2.bf16.msra.mxu0 0
        %1082 = vmatprep.subr.bf16.mxu0 0
        %1083 = vmatpush2.bf16.msra.mxu0 0
        %1084 = vmatprep.subr.bf16.mxu0 0
        %1085 = vmatpush2.bf16.msra.mxu0 0
        %1086 = vmatprep.subr.bf16.mxu0 0
        %1087 = vmatpush2.bf16.msra.mxu0 0
        %1088 = vmatprep.mubr.bf16.mxu0 0
        %1089 = vmatmul.mubr.bf16.gmra.mxu0 %v384
        %v1090 = vpop.f32.mrf.mxu0
        %v1091 = vadd.f32 0.0, %v1090
        %v1092 = vpop.f32.mrf.mxu0
        %v1093 = vpop.f32.mrf.mxu0
        %v1094 = vadd.f32 0.0, %v1093
        %v1095 = vpop.f32.mrf.mxu0
        %1096 = vdwg.mxu0
        %v1097 = vpack.c.bf16 %v1094, %v1091
        %v1099 = vunpack.c.l.b16 %v1097
        %v1100 = vunpack.c.h.b16 %v1097
        %v1101 = vpack.c.b16 %v1099, %v1099
        %v1102 = vpack.c.b16 %v1100, %v1100
        %s1105 = scalar_lea.vmem %s353, 72
        %1106 = vst.msk [vmem:[%s1105] sm:$0xf] %vm439, %v1101
        %1107 = vst.msk [vmem:[%s1105 + $0x4] sm:$0xf] %vm439, %v1102
        %s1108 = sadd.s32 %s356, 10
        %s1109 = sld [smem:[#allocation6 + %s1108]]
        %s1110 = sld [smem:[#allocation2 + %s1108]]
        %s1111 = smul.addr %s1110, 4
        %s1112 = scalar_lea.vmem %s340, %s1111
        %v1113 = vld [vmem:[%s1112] sm:$0xf]
        %v1114 = vunpack.c.l.bf16 %v1113
        %v1115 = vstv %s1109
        %v1116 = vmul.f32 %v1115, %v1114
        %s1117 = sld [smem:[#allocation7 + %s1108]]
        %s1118 = sld [smem:[#allocation4 + %s1108]]
        %s1119 = smul.addr %s1118, 4
        %s1120 = scalar_lea.vmem %s340, %s1119
        %v1121 = vld [vmem:[%s1120] sm:$0xf]
        %v1122 = vunpack.c.l.bf16 %v1121
        %v1123 = vstv %s1117
        %v1124 = vmul.f32 %v1123, %v1122
        %v1125 = vadd.f32 %v1116, %v1124
        %v1126 = vpack.c.bf16 %v1125, %v1125
        %v1128 = vsel %vm386, %v1126, 0
        %1130 = vmatprep.subr.bf16.mxu0 0
        %1131 = vmatpush1.bf16.msra.mxu0 0
        %1132 = vmatprep.subr.bf16.mxu0 0
        %1133 = vmatpush1.bf16.msra.mxu0 0
        %1134 = vmatprep.subr.bf16.mxu0 0
        %1135 = vmatpush1.bf16.msra.mxu0 0
        %1136 = vmatprep.subr.bf16.mxu0 0
        %1137 = vmatpush1.bf16.msra.mxu0 0
        %1138 = vmatprep.subr.bf16.mxu0 0
        %1139 = vmatpush1.bf16.msra.mxu0 0
        %1140 = vmatprep.subr.bf16.mxu0 0
        %1141 = vmatpush1.bf16.msra.mxu0 0
        %1142 = vmatprep.subr.bf16.mxu0 0
        %1143 = vmatpush1.bf16.msra.mxu0 0
        %1144 = vmatprep.subr.bf16.mxu0 0
        %1145 = vmatpush1.bf16.msra.mxu0 %v1128
        %1146 = vmatprep.subr.bf16.mxu0 0
        %1147 = vmatpush2.bf16.msra.mxu0 0
        %1148 = vmatprep.subr.bf16.mxu0 0
        %1149 = vmatpush2.bf16.msra.mxu0 0
        %1150 = vmatprep.subr.bf16.mxu0 0
        %1151 = vmatpush2.bf16.msra.mxu0 0
        %1152 = vmatprep.subr.bf16.mxu0 0
        %1153 = vmatpush2.bf16.msra.mxu0 0
        %1154 = vmatprep.subr.bf16.mxu0 0
        %1155 = vmatpush2.bf16.msra.mxu0 0
        %1156 = vmatprep.subr.bf16.mxu0 0
        %1157 = vmatpush2.bf16.msra.mxu0 0
        %1158 = vmatprep.subr.bf16.mxu0 0
        %1159 = vmatpush2.bf16.msra.mxu0 0
        %1160 = vmatprep.subr.bf16.mxu0 0
        %1161 = vmatpush2.bf16.msra.mxu0 0
        %1162 = vmatprep.mubr.bf16.mxu0 0
        %1163 = vmatmul.mubr.bf16.gmra.mxu0 %v384
        %v1164 = vpop.f32.mrf.mxu0
        %v1165 = vadd.f32 0.0, %v1164
        %v1166 = vpop.f32.mrf.mxu0
        %v1167 = vpop.f32.mrf.mxu0
        %v1168 = vadd.f32 0.0, %v1167
        %v1169 = vpop.f32.mrf.mxu0
        %1170 = vdwg.mxu0
        %v1171 = vpack.c.bf16 %v1168, %v1165
        %v1173 = vunpack.c.l.b16 %v1171
        %v1174 = vunpack.c.h.b16 %v1171
        %v1175 = vpack.c.b16 %v1173, %v1173
        %v1176 = vpack.c.b16 %v1174, %v1174
        %s1179 = scalar_lea.vmem %s353, 80
        %1180 = vst.msk [vmem:[%s1179] sm:$0xf] %vm439, %v1175
        %1181 = vst.msk [vmem:[%s1179 + $0x4] sm:$0xf] %vm439, %v1176
        %s1182 = sadd.s32 %s356, 11
        %s1183 = sld [smem:[#allocation6 + %s1182]]
        %s1184 = sld [smem:[#allocation2 + %s1182]]
        %s1185 = smul.addr %s1184, 4
        %s1186 = scalar_lea.vmem %s340, %s1185
        %v1187 = vld [vmem:[%s1186] sm:$0xf]
        %v1188 = vunpack.c.l.bf16 %v1187
        %v1189 = vstv %s1183
        %v1190 = vmul.f32 %v1189, %v1188
        %s1191 = sld [smem:[#allocation7 + %s1182]]
        %s1192 = sld [smem:[#allocation4 + %s1182]]
        %s1193 = smul.addr %s1192, 4
        %s1194 = scalar_lea.vmem %s340, %s1193
        %v1195 = vld [vmem:[%s1194] sm:$0xf]
        %v1196 = vunpack.c.l.bf16 %v1195
        %v1197 = vstv %s1191
        %v1198 = vmul.f32 %v1197, %v1196
        %v1199 = vadd.f32 %v1190, %v1198
        %v1200 = vpack.c.bf16 %v1199, %v1199
        %v1202 = vsel %vm386, %v1200, 0
        %1204 = vmatprep.subr.bf16.mxu0 0
        %1205 = vmatpush1.bf16.msra.mxu0 0
        %1206 = vmatprep.subr.bf16.mxu0 0
        %1207 = vmatpush1.bf16.msra.mxu0 0
        %1208 = vmatprep.subr.bf16.mxu0 0
        %1209 = vmatpush1.bf16.msra.mxu0 0
        %1210 = vmatprep.subr.bf16.mxu0 0
        %1211 = vmatpush1.bf16.msra.mxu0 0
        %1212 = vmatprep.subr.bf16.mxu0 0
        %1213 = vmatpush1.bf16.msra.mxu0 0
        %1214 = vmatprep.subr.bf16.mxu0 0
        %1215 = vmatpush1.bf16.msra.mxu0 0
        %1216 = vmatprep.subr.bf16.mxu0 0
        %1217 = vmatpush1.bf16.msra.mxu0 0
        %1218 = vmatprep.subr.bf16.mxu0 0
        %1219 = vmatpush1.bf16.msra.mxu0 %v1202
        %1220 = vmatprep.subr.bf16.mxu0 0
        %1221 = vmatpush2.bf16.msra.mxu0 0
        %1222 = vmatprep.subr.bf16.mxu0 0
        %1223 = vmatpush2.bf16.msra.mxu0 0
        %1224 = vmatprep.subr.bf16.mxu0 0
        %1225 = vmatpush2.bf16.msra.mxu0 0
        %1226 = vmatprep.subr.bf16.mxu0 0
        %1227 = vmatpush2.bf16.msra.mxu0 0
        %1228 = vmatprep.subr.bf16.mxu0 0
        %1229 = vmatpush2.bf16.msra.mxu0 0
        %1230 = vmatprep.subr.bf16.mxu0 0
        %1231 = vmatpush2.bf16.msra.mxu0 0
        %1232 = vmatprep.subr.bf16.mxu0 0
        %1233 = vmatpush2.bf16.msra.mxu0 0
        %1234 = vmatprep.subr.bf16.mxu0 0
        %1235 = vmatpush2.bf16.msra.mxu0 0
        %1236 = vmatprep.mubr.bf16.mxu0 0
        %1237 = vmatmul.mubr.bf16.gmra.mxu0 %v384
        %v1238 = vpop.f32.mrf.mxu0
        %v1239 = vadd.f32 0.0, %v1238
        %v1240 = vpop.f32.mrf.mxu0
        %v1241 = vpop.f32.mrf.mxu0
        %v1242 = vadd.f32 0.0, %v1241
        %v1243 = vpop.f32.mrf.mxu0
        %1244 = vdwg.mxu0
        %v1245 = vpack.c.bf16 %v1242, %v1239
        %v1247 = vunpack.c.l.b16 %v1245
        %v1248 = vunpack.c.h.b16 %v1245
        %v1249 = vpack.c.b16 %v1247, %v1247
        %v1250 = vpack.c.b16 %v1248, %v1248
        %s1253 = scalar_lea.vmem %s353, 88
        %1254 = vst.msk [vmem:[%s1253] sm:$0xf] %vm439, %v1249
        %1255 = vst.msk [vmem:[%s1253 + $0x4] sm:$0xf] %vm439, %v1250
        %s1256 = sadd.s32 %s356, 12
        %s1257 = sld [smem:[#allocation6 + %s1256]]
        %s1258 = sld [smem:[#allocation2 + %s1256]]
        %s1259 = smul.addr %s1258, 4
        %s1260 = scalar_lea.vmem %s340, %s1259
        %v1261 = vld [vmem:[%s1260] sm:$0xf]
        %v1262 = vunpack.c.l.bf16 %v1261
        %v1263 = vstv %s1257
        %v1264 = vmul.f32 %v1263, %v1262
        %s1265 = sld [smem:[#allocation7 + %s1256]]
        %s1266 = sld [smem:[#allocation4 + %s1256]]
        %s1267 = smul.addr %s1266, 4
        %s1268 = scalar_lea.vmem %s340, %s1267
        %v1269 = vld [vmem:[%s1268] sm:$0xf]
        %v1270 = vunpack.c.l.bf16 %v1269
        %v1271 = vstv %s1265
        %v1272 = vmul.f32 %v1271, %v1270
        %v1273 = vadd.f32 %v1264, %v1272
        %v1274 = vpack.c.bf16 %v1273, %v1273
        %v1276 = vsel %vm386, %v1274, 0
        %1278 = vmatprep.subr.bf16.mxu0 0
        %1279 = vmatpush1.bf16.msra.mxu0 0
        %1280 = vmatprep.subr.bf16.mxu0 0
        %1281 = vmatpush1.bf16.msra.mxu0 0
        %1282 = vmatprep.subr.bf16.mxu0 0
        %1283 = vmatpush1.bf16.msra.mxu0 0
        %1284 = vmatprep.subr.bf16.mxu0 0
        %1285 = vmatpush1.bf16.msra.mxu0 0
        %1286 = vmatprep.subr.bf16.mxu0 0
        %1287 = vmatpush1.bf16.msra.mxu0 0
        %1288 = vmatprep.subr.bf16.mxu0 0
        %1289 = vmatpush1.bf16.msra.mxu0 0
        %1290 = vmatprep.subr.bf16.mxu0 0
        %1291 = vmatpush1.bf16.msra.mxu0 0
        %1292 = vmatprep.subr.bf16.mxu0 0
        %1293 = vmatpush1.bf16.msra.mxu0 %v1276
        %1294 = vmatprep.subr.bf16.mxu0 0
        %1295 = vmatpush2.bf16.msra.mxu0 0
        %1296 = vmatprep.subr.bf16.mxu0 0
        %1297 = vmatpush2.bf16.msra.mxu0 0
        %1298 = vmatprep.subr.bf16.mxu0 0
        %1299 = vmatpush2.bf16.msra.mxu0 0
        %1300 = vmatprep.subr.bf16.mxu0 0
        %1301 = vmatpush2.bf16.msra.mxu0 0
        %1302 = vmatprep.subr.bf16.mxu0 0
        %1303 = vmatpush2.bf16.msra.mxu0 0
        %1304 = vmatprep.subr.bf16.mxu0 0
        %1305 = vmatpush2.bf16.msra.mxu0 0
        %1306 = vmatprep.subr.bf16.mxu0 0
        %1307 = vmatpush2.bf16.msra.mxu0 0
        %1308 = vmatprep.subr.bf16.mxu0 0
        %1309 = vmatpush2.bf16.msra.mxu0 0
        %1310 = vmatprep.mubr.bf16.mxu0 0
        %1311 = vmatmul.mubr.bf16.gmra.mxu0 %v384
        %v1312 = vpop.f32.mrf.mxu0
        %v1313 = vadd.f32 0.0, %v1312
        %v1314 = vpop.f32.mrf.mxu0
        %v1315 = vpop.f32.mrf.mxu0
        %v1316 = vadd.f32 0.0, %v1315
        %v1317 = vpop.f32.mrf.mxu0
        %1318 = vdwg.mxu0
        %v1319 = vpack.c.bf16 %v1316, %v1313
        %v1321 = vunpack.c.l.b16 %v1319
        %v1322 = vunpack.c.h.b16 %v1319
        %v1323 = vpack.c.b16 %v1321, %v1321
        %v1324 = vpack.c.b16 %v1322, %v1322
        %s1327 = scalar_lea.vmem %s353, 96
        %1328 = vst.msk [vmem:[%s1327] sm:$0xf] %vm439, %v1323
        %1329 = vst.msk [vmem:[%s1327 + $0x4] sm:$0xf] %vm439, %v1324
        %s1330 = sadd.s32 %s356, 13
        %s1331 = sld [smem:[#allocation6 + %s1330]]
        %s1332 = sld [smem:[#allocation2 + %s1330]]
        %s1333 = smul.addr %s1332, 4
        %s1334 = scalar_lea.vmem %s340, %s1333
        %v1335 = vld [vmem:[%s1334] sm:$0xf]
        %v1336 = vunpack.c.l.bf16 %v1335
        %v1337 = vstv %s1331
        %v1338 = vmul.f32 %v1337, %v1336
        %s1339 = sld [smem:[#allocation7 + %s1330]]
        %s1340 = sld [smem:[#allocation4 + %s1330]]
        %s1341 = smul.addr %s1340, 4
        %s1342 = scalar_lea.vmem %s340, %s1341
        %v1343 = vld [vmem:[%s1342] sm:$0xf]
        %v1344 = vunpack.c.l.bf16 %v1343
        %v1345 = vstv %s1339
        %v1346 = vmul.f32 %v1345, %v1344
        %v1347 = vadd.f32 %v1338, %v1346
        %v1348 = vpack.c.bf16 %v1347, %v1347
        %v1350 = vsel %vm386, %v1348, 0
        %1352 = vmatprep.subr.bf16.mxu0 0
        %1353 = vmatpush1.bf16.msra.mxu0 0
        %1354 = vmatprep.subr.bf16.mxu0 0
        %1355 = vmatpush1.bf16.msra.mxu0 0
        %1356 = vmatprep.subr.bf16.mxu0 0
        %1357 = vmatpush1.bf16.msra.mxu0 0
        %1358 = vmatprep.subr.bf16.mxu0 0
        %1359 = vmatpush1.bf16.msra.mxu0 0
        %1360 = vmatprep.subr.bf16.mxu0 0
        %1361 = vmatpush1.bf16.msra.mxu0 0
        %1362 = vmatprep.subr.bf16.mxu0 0
        %1363 = vmatpush1.bf16.msra.mxu0 0
        %1364 = vmatprep.subr.bf16.mxu0 0
        %1365 = vmatpush1.bf16.msra.mxu0 0
        %1366 = vmatprep.subr.bf16.mxu0 0
        %1367 = vmatpush1.bf16.msra.mxu0 %v1350
        %1368 = vmatprep.subr.bf16.mxu0 0
        %1369 = vmatpush2.bf16.msra.mxu0 0
        %1370 = vmatprep.subr.bf16.mxu0 0
        %1371 = vmatpush2.bf16.msra.mxu0 0
        %1372 = vmatprep.subr.bf16.mxu0 0
        %1373 = vmatpush2.bf16.msra.mxu0 0
        %1374 = vmatprep.subr.bf16.mxu0 0
        %1375 = vmatpush2.bf16.msra.mxu0 0
        %1376 = vmatprep.subr.bf16.mxu0 0
        %1377 = vmatpush2.bf16.msra.mxu0 0
        %1378 = vmatprep.subr.bf16.mxu0 0
        %1379 = vmatpush2.bf16.msra.mxu0 0
        %1380 = vmatprep.subr.bf16.mxu0 0
        %1381 = vmatpush2.bf16.msra.mxu0 0
        %1382 = vmatprep.subr.bf16.mxu0 0
        %1383 = vmatpush2.bf16.msra.mxu0 0
        %1384 = vmatprep.mubr.bf16.mxu0 0
        %1385 = vmatmul.mubr.bf16.gmra.mxu0 %v384
        %v1386 = vpop.f32.mrf.mxu0
        %v1387 = vadd.f32 0.0, %v1386
        %v1388 = vpop.f32.mrf.mxu0
        %v1389 = vpop.f32.mrf.mxu0
        %v1390 = vadd.f32 0.0, %v1389
        %v1391 = vpop.f32.mrf.mxu0
        %1392 = vdwg.mxu0
        %v1393 = vpack.c.bf16 %v1390, %v1387
        %v1395 = vunpack.c.l.b16 %v1393
        %v1396 = vunpack.c.h.b16 %v1393
        %v1397 = vpack.c.b16 %v1395, %v1395
        %v1398 = vpack.c.b16 %v1396, %v1396
        %s1401 = scalar_lea.vmem %s353, 104
        %1402 = vst.msk [vmem:[%s1401] sm:$0xf] %vm439, %v1397
        %1403 = vst.msk [vmem:[%s1401 + $0x4] sm:$0xf] %vm439, %v1398
        %s1404 = sadd.s32 %s356, 14
        %s1405 = sld [smem:[#allocation6 + %s1404]]
        %s1406 = sld [smem:[#allocation2 + %s1404]]
        %s1407 = smul.addr %s1406, 4
        %s1408 = scalar_lea.vmem %s340, %s1407
        %v1409 = vld [vmem:[%s1408] sm:$0xf]
        %v1410 = vunpack.c.l.bf16 %v1409
        %v1411 = vstv %s1405
        %v1412 = vmul.f32 %v1411, %v1410
        %s1413 = sld [smem:[#allocation7 + %s1404]]
        %s1414 = sld [smem:[#allocation4 + %s1404]]
        %s1415 = smul.addr %s1414, 4
        %s1416 = scalar_lea.vmem %s340, %s1415
        %v1417 = vld [vmem:[%s1416] sm:$0xf]
        %v1418 = vunpack.c.l.bf16 %v1417
        %v1419 = vstv %s1413
        %v1420 = vmul.f32 %v1419, %v1418
        %v1421 = vadd.f32 %v1412, %v1420
        %v1422 = vpack.c.bf16 %v1421, %v1421
        %v1424 = vsel %vm386, %v1422, 0
        %1426 = vmatprep.subr.bf16.mxu0 0
        %1427 = vmatpush1.bf16.msra.mxu0 0
        %1428 = vmatprep.subr.bf16.mxu0 0
        %1429 = vmatpush1.bf16.msra.mxu0 0
        %1430 = vmatprep.subr.bf16.mxu0 0
        %1431 = vmatpush1.bf16.msra.mxu0 0
        %1432 = vmatprep.subr.bf16.mxu0 0
        %1433 = vmatpush1.bf16.msra.mxu0 0
        %1434 = vmatprep.subr.bf16.mxu0 0
        %1435 = vmatpush1.bf16.msra.mxu0 0
        %1436 = vmatprep.subr.bf16.mxu0 0
        %1437 = vmatpush1.bf16.msra.mxu0 0
        %1438 = vmatprep.subr.bf16.mxu0 0
        %1439 = vmatpush1.bf16.msra.mxu0 0
        %1440 = vmatprep.subr.bf16.mxu0 0
        %1441 = vmatpush1.bf16.msra.mxu0 %v1424
        %1442 = vmatprep.subr.bf16.mxu0 0
        %1443 = vmatpush2.bf16.msra.mxu0 0
        %1444 = vmatprep.subr.bf16.mxu0 0
        %1445 = vmatpush2.bf16.msra.mxu0 0
        %1446 = vmatprep.subr.bf16.mxu0 0
        %1447 = vmatpush2.bf16.msra.mxu0 0
        %1448 = vmatprep.subr.bf16.mxu0 0
        %1449 = vmatpush2.bf16.msra.mxu0 0
        %1450 = vmatprep.subr.bf16.mxu0 0
        %1451 = vmatpush2.bf16.msra.mxu0 0
        %1452 = vmatprep.subr.bf16.mxu0 0
        %1453 = vmatpush2.bf16.msra.mxu0 0
        %1454 = vmatprep.subr.bf16.mxu0 0
        %1455 = vmatpush2.bf16.msra.mxu0 0
        %1456 = vmatprep.subr.bf16.mxu0 0
        %1457 = vmatpush2.bf16.msra.mxu0 0
        %1458 = vmatprep.mubr.bf16.mxu0 0
        %1459 = vmatmul.mubr.bf16.gmra.mxu0 %v384
        %v1460 = vpop.f32.mrf.mxu0
        %v1461 = vadd.f32 0.0, %v1460
        %v1462 = vpop.f32.mrf.mxu0
        %v1463 = vpop.f32.mrf.mxu0
        %v1464 = vadd.f32 0.0, %v1463
        %v1465 = vpop.f32.mrf.mxu0
        %1466 = vdwg.mxu0
        %v1467 = vpack.c.bf16 %v1464, %v1461
        %v1469 = vunpack.c.l.b16 %v1467
        %v1470 = vunpack.c.h.b16 %v1467
        %v1471 = vpack.c.b16 %v1469, %v1469
        %v1472 = vpack.c.b16 %v1470, %v1470
        %s1475 = scalar_lea.vmem %s353, 112
        %1476 = vst.msk [vmem:[%s1475] sm:$0xf] %vm439, %v1471
        %1477 = vst.msk [vmem:[%s1475 + $0x4] sm:$0xf] %vm439, %v1472
        %s1478 = sadd.s32 %s356, 15
        %s1479 = sld [smem:[#allocation6 + %s1478]]
        %s1480 = sld [smem:[#allocation2 + %s1478]]
        %s1481 = smul.addr %s1480, 4
        %s1482 = scalar_lea.vmem %s340, %s1481
        %v1483 = vld [vmem:[%s1482] sm:$0xf]
        %v1484 = vunpack.c.l.bf16 %v1483
        %v1485 = vstv %s1479
        %v1486 = vmul.f32 %v1485, %v1484
        %s1487 = sld [smem:[#allocation7 + %s1478]]
        %s1488 = sld [smem:[#allocation4 + %s1478]]
        %s1489 = smul.addr %s1488, 4
        %s1490 = scalar_lea.vmem %s340, %s1489
        %v1491 = vld [vmem:[%s1490] sm:$0xf]
        %v1492 = vunpack.c.l.bf16 %v1491
        %v1493 = vstv %s1487
        %v1494 = vmul.f32 %v1493, %v1492
        %v1495 = vadd.f32 %v1486, %v1494
        %v1496 = vpack.c.bf16 %v1495, %v1495
        %v1498 = vsel %vm386, %v1496, 0
        %1500 = vmatprep.subr.bf16.mxu0 0
        %1501 = vmatpush1.bf16.msra.mxu0 0
        %1502 = vmatprep.subr.bf16.mxu0 0
        %1503 = vmatpush1.bf16.msra.mxu0 0
        %1504 = vmatprep.subr.bf16.mxu0 0
        %1505 = vmatpush1.bf16.msra.mxu0 0
        %1506 = vmatprep.subr.bf16.mxu0 0
        %1507 = vmatpush1.bf16.msra.mxu0 0
        %1508 = vmatprep.subr.bf16.mxu0 0
        %1509 = vmatpush1.bf16.msra.mxu0 0
        %1510 = vmatprep.subr.bf16.mxu0 0
        %1511 = vmatpush1.bf16.msra.mxu0 0
        %1512 = vmatprep.subr.bf16.mxu0 0
        %1513 = vmatpush1.bf16.msra.mxu0 0
        %1514 = vmatprep.subr.bf16.mxu0 0
        %1515 = vmatpush1.bf16.msra.mxu0 %v1498
        %1516 = vmatprep.subr.bf16.mxu0 0
        %1517 = vmatpush2.bf16.msra.mxu0 0
        %1518 = vmatprep.subr.bf16.mxu0 0
        %1519 = vmatpush2.bf16.msra.mxu0 0
        %1520 = vmatprep.subr.bf16.mxu0 0
        %1521 = vmatpush2.bf16.msra.mxu0 0
        %1522 = vmatprep.subr.bf16.mxu0 0
        %1523 = vmatpush2.bf16.msra.mxu0 0
        %1524 = vmatprep.subr.bf16.mxu0 0
        %1525 = vmatpush2.bf16.msra.mxu0 0
        %1526 = vmatprep.subr.bf16.mxu0 0
        %1527 = vmatpush2.bf16.msra.mxu0 0
        %1528 = vmatprep.subr.bf16.mxu0 0
        %1529 = vmatpush2.bf16.msra.mxu0 0
        %1530 = vmatprep.subr.bf16.mxu0 0
        %1531 = vmatpush2.bf16.msra.mxu0 0
        %1532 = vmatprep.mubr.bf16.mxu0 0
        %1533 = vmatmul.mubr.bf16.gmra.mxu0 %v384
        %v1534 = vpop.f32.mrf.mxu0
        %v1535 = vadd.f32 0.0, %v1534
        %v1536 = vpop.f32.mrf.mxu0
        %v1537 = vpop.f32.mrf.mxu0
        %v1538 = vadd.f32 0.0, %v1537
        %v1539 = vpop.f32.mrf.mxu0
        %1540 = vdwg.mxu0
        %v1541 = vpack.c.bf16 %v1538, %v1535
        %v1543 = vunpack.c.l.b16 %v1541
        %v1544 = vunpack.c.h.b16 %v1541
        %v1545 = vpack.c.b16 %v1543, %v1543
        %v1546 = vpack.c.b16 %v1544, %v1544
        %s1549 = scalar_lea.vmem %s353, 120
        %1550 = vst.msk [vmem:[%s1549] sm:$0xf] %vm439, %v1545
        %1551 = vst.msk [vmem:[%s1549 + $0x4] sm:$0xf] %vm439, %v1546
        %s1552 = smul.u32 16, %s27
        %p1553 = scmp.lt.s32.totalorder %s25, 1
        %s1554 = scalar_select %p1553, %s25, 1
        %p1555 = scmp.lt.s32.totalorder %s1552, 15
        %s1556 = scalar_select %p1555, %s1552, 15
        %p1557 = scmp.lt.s32.totalorder %s26, 0
        %s1558 = scalar_select %p1557, %s26, 0
        %s1559 = smul.addr %s1556, 2
        %s1560 = sadd.s32 %s1558, %s1559
        %s1561 = smul.addr %s1554, 32
        %s1562 = sadd.s32 %s1560, %s1561
        %s1563 = smul.addr %s1562, 4
        %s1564 = scalar_lea.vmem %s6, %s1563
        // Predicated region
        $region61: #{tpu_custom_call.1} parent=43 // pred_check
          %p1565 = pneg %p194
        $region62: #{tpu_custom_call.1} parent=43 // pred_check_branch
          %1567 = sbr.rel (%p1565) target = $region64
        $region63: #{tpu_custom_call.1} parent=43 // pred_region
          %s1568 = smul.u32 16, %s27
        $region64: #{tpu_custom_call.1} parent=43 // pred_fallthru
          _
      $region44: #{tpu_custom_call.1} parent=5 // pred_fallthru
        _
      %p1569 = scmp.le.s32.totalorder 2, %s15
      // Predicated region
      $region65: #{tpu_custom_call.1} parent=5 // pred_check
        %p1570 = pneg %p1569
      $region66: #{tpu_custom_call.1} parent=5 // pred_check_branch
        %1572 = sbr.rel (%p1570) target = $region68
      $region67: #{tpu_custom_call.1} parent=5 // pred_region
        %s1573 = ssub.s32 %s15, 2
        // Predicated region
        $region69: #{tpu_custom_call.1} parent=67 // pred_check
          %p1574 = pneg %p200
        $region70: #{tpu_custom_call.1} parent=67 // pred_check_branch
          %1576 = sbr.rel (%p1574) target = $region72
        $region71: #{tpu_custom_call.1} parent=67 // pred_region
          %s1577 = smul.u32 16, %s30
          %p1578 = scmp.lt.s32.totalorder %s28, 1
          %s1579 = scalar_select %p1578, %s28, 1
          %p1580 = scmp.lt.s32.totalorder %s1577, 15
          %s1581 = scalar_select %p1580, %s1577, 15
          %p1582 = scmp.lt.s32.totalorder %s29, 0
          %s1583 = scalar_select %p1582, %s29, 0
          %s1584 = smul.addr %s1581, 2
          %s1585 = sadd.s32 %s1583, %s1584
          %s1586 = smul.addr %s1579, 32
          %s1587 = sadd.s32 %s1585, %s1586
          %s1588 = smul.addr %s1587, 4
          %s1589 = scalar_lea.vmem %s6, %s1588
        $region72: #{tpu_custom_call.1} parent=67 // pred_fallthru
          _
      $region68: #{tpu_custom_call.1} parent=5 // pred_fallthru
        _
    $region6: #{tpu_custom_call.1} parent=1 // loop_footer
      %s19 = sadd.s32 1, %s15
    $region7: #{tpu_custom_call.1} parent=1 // loop_footer_branch
      %14 = sbr.rel target = $region3
    $region8: #{tpu_custom_call.1} parent=1 // loop_exit
      _
    %1590 = vsyncpa [#allocation3], 1
    %s1591 = scalar_lea.sflag [#allocation3], 1
    %1592 = vsyncpa %s1591, 1
    %1593 = vsyncpa [#allocation5], 1
    %1594 = vsyncpa [#allocation8], 1

</llo_original>
